<compile_context>
chip_gen: v6e
topology: v6e:2x2x1
jax: 0.10.0
libtpu: 0.0.40
codegen_flags: <defaults>
</compile_context>

<pallas_src>
import functools

import jax
import jax.numpy as jnp
from jax import lax
from jax.experimental import pallas as pl
from jax.experimental.pallas import tpu as pltpu

EPS = 1e-5


# ---------------------------------------------------------------------------
# Fused MV4 block kernel: one grid step == one image, channel-major (C, HWp).
# ---------------------------------------------------------------------------
def _mv4_kernel(x_ref, w1_ref, b1_ref, dw_ref, b2_ref, m_ref, *rest,
                W, HW, use_attention, residual):
    if use_attention:
        (sew1_ref, seb1_ref, sew2_ref, seb2_ref, w3_ref, b3_ref, o_ref) = rest
    else:
        w3_ref, b3_ref, o_ref = rest

    x = x_ref[0]                                            # (Cin, HWp) f32
    HWp = x.shape[1]

    # ---- conv1 (1x1, BN folded) + ReLU6 : bf16 MXU matmul -------------------
    h = jnp.dot(w1_ref[...], x.astype(jnp.bfloat16),
                preferred_element_type=jnp.float32)
    h = jnp.clip(h + b1_ref[...], 0.0, 6.0)                 # (hidden, HWp)

    # ---- depthwise 3x3 (stride 1, pad 1, BN folded) + ReLU6 -----------------
    dw = dw_ref[...]                                         # (hidden, 9), BN-scaled
    acc = h * dw[:, 4:5]                                     # center tap: always valid
    for dy in (-1, 0, 1):
        for dx in (-1, 0, 1):
            if dy == 0 and dx == 0:
                continue
            t = (dy + 1) * 3 + (dx + 1)
            d = dy * W + dx
            # src[m] = h[m + d]   (roll semantics: out[i] = in[i - shift])
            src = pltpu.roll(h, (-d) % HWp, 1)
            acc = acc + (src * m_ref[t:t + 1, :]) * dw[:, t:t + 1]
    h = jnp.clip(acc + b2_ref[...], 0.0, 6.0)                # (hidden, HWp)

    # ---- squeeze-excite gate, folded into conv3's weight columns ------------
    w3 = w3_ref[...]                                          # (Cout, hidden) f32
    if use_attention:
        # Mean-pool over valid lanes via an MXU dot, directly in row layout.
        pooled = lax.dot_general(
            m_ref[4:5, :], h, (((1,), (1,)), ((), ())),
            preferred_element_type=jnp.float32) * (1.0 / HW)  # (1, hidden)
        g = jnp.dot(pooled, sew1_ref[...], preferred_element_type=jnp.float32)
        g = jnp.maximum(g + seb1_ref[...], 0.0)               # (1, Cr)
        g = jnp.dot(g, sew2_ref[...], preferred_element_type=jnp.float32)
        g = jax.nn.sigmoid(g + seb2_ref[...])                 # (1, hidden)
        w3 = w3 * g                                           # (W3*g^T)@h == W3@(h*g)

    # ---- conv3 (1x1, BN folded) (+ residual) --------------------------------
    y = jnp.dot(w3.astype(jnp.bfloat16), h.astype(jnp.bfloat16),
                preferred_element_type=jnp.float32)           # (Cout, HWp)
    y = y + b3_ref[...]
    if residual:
        y = y + x
    o_ref[0] = y.astype(o_ref.dtype)


def _full(shape):
    return pl.BlockSpec(shape, lambda n: tuple(0 for _ in shape))


def _fold_bn(w, gamma, beta, mean, var, conv_bias):
    """Fold eval-mode BN into per-output-channel weight scale + bias."""
    scale = gamma / jnp.sqrt(var + EPS)
    w_scaled = w * scale[:, None]
    bias = beta + (conv_bias - mean) * scale
    return w_scaled, bias.reshape(-1, 1)


# ---------------------------------------------------------------------------
# Full MV4Block forward (NCHW in / NCHW out, matching the PyTorch module)
# ---------------------------------------------------------------------------
def mv4_block_forward(x_nchw, params, *, use_attention):
    N, Cin, H, W = x_nchw.shape
    hidden = params["conv1_w"].shape[0]
    Cout = params["conv3_w"].shape[0]
    HW = H * W
    HWp = ((HW + 127) // 128) * 128             # lane-dense stores
    residual = (Cin == Cout)

    x = x_nchw.reshape(N, Cin, HW).astype(jnp.float32)
    if HWp != HW:
        x = jnp.pad(x, ((0, 0), (0, 0), (0, HWp - HW)))

    # BN scales folded into the weights; only folded biases enter the kernel.
    w1, b1 = _fold_bn(params["conv1_w"][:, :, 0, 0], params["bn1_g"], params["bn1_b"],
                      params["bn1_m"], params["bn1_v"], params["conv1_b"])
    dw, b2 = _fold_bn(params["dw_w"][:, 0].reshape(hidden, 9), params["bn2_g"],
                      params["bn2_b"], params["bn2_m"], params["bn2_v"], params["dw_b"])
    w3, b3 = _fold_bn(params["conv3_w"][:, :, 0, 0], params["bn3_g"], params["bn3_b"],
                      params["bn3_m"], params["bn3_v"], params["conv3_b"])

    # Precomputed depthwise validity masks (9, HWp); padded lanes are invalid.
    lane = jnp.arange(HWp)
    row, col = lane // W, lane % W
    real = lane < HW
    mask = jnp.stack([
        real & (row + dy >= 0) & (row + dy < H) & (col + dx >= 0) & (col + dx < W)
        for dy in (-1, 0, 1) for dx in (-1, 0, 1)
    ]).astype(jnp.float32)

    args = [x, w1.astype(jnp.bfloat16), b1, dw, b2, mask]
    in_specs = [pl.BlockSpec((1, Cin, HWp), lambda n: (n, 0, 0)),
                _full((hidden, Cin)), _full((hidden, 1)),
                _full((hidden, 9)), _full((hidden, 1)), _full((9, HWp))]
    if use_attention:
        Cr = params["se_w1"].shape[0]
        args += [params["se_w1"][:, :, 0, 0].T, params["se_b1"].reshape(1, Cr),
                 params["se_w2"][:, :, 0, 0].T, params["se_b2"].reshape(1, hidden)]
        in_specs += [_full((hidden, Cr)), _full((1, Cr)),
                     _full((Cr, hidden)), _full((1, hidden))]
    args += [w3, b3]
    in_specs += [_full((Cout, hidden)), _full((Cout, 1))]

    kernel = functools.partial(_mv4_kernel, W=W, HW=HW,
                               use_attention=use_attention, residual=residual)

    # Per-step VMEM: double-buffered x/out blocks + ~6-8 live (hidden, HWp)
    # f32 temporaries + weights; keep headroom, cap inside v7x's 64 MiB.
    vmem_est = 4 * HWp * (2 * Cin + 2 * Cout + 8 * hidden) + (2 << 20)
    vmem_limit = int(min(max(vmem_est, 32 << 20), 64 << 20))

    y = pl.pallas_call(
        kernel,
        out_shape=jax.ShapeDtypeStruct((N, Cout, HWp), jnp.float32),
        grid_spec=pltpu.PrefetchScalarGridSpec(
            num_scalar_prefetch=0,
            grid=(N,),
            in_specs=in_specs,
            out_specs=pl.BlockSpec((1, Cout, HWp), lambda n: (n, 0, 0)),
        ),
        compiler_params=pltpu.CompilerParams(
            dimension_semantics=("parallel",),
            vmem_limit_bytes=vmem_limit),
    )(*args)
    if HWp != HW:
        y = y[:, :, :HW]
    return y.reshape(N, Cout, H, W)                           # already NCHW


# ---------------------------------------------------------------------------
# Parameter initialization (deterministic, PyTorch-convention shapes)
# ---------------------------------------------------------------------------
def init_params(key, in_channels, out_channels, expansion_ratio=4, use_attention=True):
    hidden = int(in_channels * expansion_ratio)
    ks = jax.random.split(key, 16)
    p = {}
    p["conv1_w"] = 0.1 * jax.random.normal(ks[0], (hidden, in_channels, 1, 1), jnp.float32)
    p["conv1_b"] = 0.1 * jax.random.normal(ks[1], (hidden,), jnp.float32)
    p["bn1_g"] = 1.0 + 0.1 * jax.random.normal(ks[2], (hidden,), jnp.float32)
    p["bn1_b"] = 0.1 * jax.random.normal(ks[3], (hidden,), jnp.float32)
    p["bn1_m"] = 0.1 * jax.random.normal(ks[4], (hidden,), jnp.float32)
    p["bn1_v"] = jax.random.uniform(ks[5], (hidden,), jnp.float32, 0.5, 1.5)
    p["dw_w"] = 0.1 * jax.random.normal(ks[6], (hidden, 1, 3, 3), jnp.float32)
    p["dw_b"] = 0.1 * jax.random.normal(ks[7], (hidden,), jnp.float32)
    p["bn2_g"] = 1.0 + 0.1 * jax.random.normal(ks[8], (hidden,), jnp.float32)
    p["bn2_b"] = 0.1 * jax.random.normal(ks[9], (hidden,), jnp.float32)
    p["bn2_m"] = 0.1 * jax.random.normal(ks[10], (hidden,), jnp.float32)
    p["bn2_v"] = jax.random.uniform(ks[11], (hidden,), jnp.float32, 0.5, 1.5)
    if use_attention:
        cr = hidden // 4
        kse = jax.random.split(ks[12], 4)
        p["se_w1"] = 0.1 * jax.random.normal(kse[0], (cr, hidden, 1, 1), jnp.float32)
        p["se_b1"] = 0.1 * jax.random.normal(kse[1], (cr,), jnp.float32)
        p["se_w2"] = 0.1 * jax.random.normal(kse[2], (hidden, cr, 1, 1), jnp.float32)
        p["se_b2"] = 0.1 * jax.random.normal(kse[3], (hidden,), jnp.float32)
    p["conv3_w"] = 0.1 * jax.random.normal(ks[13], (out_channels, hidden, 1, 1), jnp.float32)
    p["conv3_b"] = 0.1 * jax.random.normal(ks[14], (out_channels,), jnp.float32)
    kb3 = jax.random.split(ks[15], 4)
    p["bn3_g"] = 1.0 + 0.1 * jax.random.normal(kb3[0], (out_channels,), jnp.float32)
    p["bn3_b"] = 0.1 * jax.random.normal(kb3[1], (out_channels,), jnp.float32)
    p["bn3_m"] = 0.1 * jax.random.normal(kb3[2], (out_channels,), jnp.float32)
    p["bn3_v"] = jax.random.uniform(kb3[3], (out_channels,), jnp.float32, 0.5, 1.5)
    return p


# ---------------------------------------------------------------------------
# Pure-JAX f32 reference (eval-mode BN), for a correctness check
# ---------------------------------------------------------------------------
def ref_forward(x_nchw, p, *, use_attention):
    x = jnp.transpose(x_nchw, (0, 2, 3, 1)).astype(jnp.float32)
    Cin = x.shape[-1]
    Cout = p["conv3_w"].shape[0]
    hidden = p["conv1_w"].shape[0]

    def bn(y, g, b, m, v):
        return (y - m) / jnp.sqrt(v + EPS) * g + b

    h = jnp.einsum("nhwc,cd->nhwd", x, jnp.transpose(p["conv1_w"][:, :, 0, 0], (1, 0))) + p["conv1_b"]
    h = jnp.clip(bn(h, p["bn1_g"], p["bn1_b"], p["bn1_m"], p["bn1_v"]), 0, 6)

    dwk = jnp.transpose(p["dw_w"][:, 0], (1, 2, 0))[:, :, None, :]  # (3,3,1,hidden) HWIO
    h = jax.lax.conv_general_dilated(
        h, dwk, (1, 1), "SAME",
        dimension_numbers=("NHWC", "HWIO", "NHWC"),
        feature_group_count=hidden) + p["dw_b"]
    h = jnp.clip(bn(h, p["bn2_g"], p["bn2_b"], p["bn2_m"], p["bn2_v"]), 0, 6)

    if use_attention:
        pooled = jnp.mean(h, axis=(1, 2), keepdims=True)
        s = jnp.einsum("nhwc,cd->nhwd", pooled,
                       jnp.transpose(p["se_w1"][:, :, 0, 0], (1, 0))) + p["se_b1"]
        s = jnp.maximum(s, 0.0)
        a = jax.nn.sigmoid(jnp.einsum("nhwc,cd->nhwd", s,
                                      jnp.transpose(p["se_w2"][:, :, 0, 0], (1, 0))) + p["se_b2"])
        h = h * a

    y = jnp.einsum("nhwc,cd->nhwd", h, jnp.transpose(p["conv3_w"][:, :, 0, 0], (1, 0))) + p["conv3_b"]
    y = bn(y, p["bn3_g"], p["bn3_b"], p["bn3_m"], p["bn3_v"])
    if Cin == Cout:
        y = y + x
    return jnp.transpose(y, (0, 3, 1, 2))


if __name__ == "__main__":
    # batch=2, in=out channels=8, spatial=16x16, expansion=4 -> hidden=32, SE cr=8
    N, Cin, H, W = 2, 8, 16, 16
    Cout = 8

    key = jax.random.PRNGKey(0)
    k_x, k_p = jax.random.split(key)
    x = jax.random.normal(k_x, (N, Cin, H, W), jnp.float32)
    params = init_params(k_p, Cin, Cout, expansion_ratio=4, use_attention=True)

    for use_attention in (True, False):
        out = jax.block_until_ready(
            mv4_block_forward(x, params, use_attention=use_attention))
        ref = jax.block_until_ready(
            ref_forward(x, params, use_attention=use_attention))
        assert out.shape == (N, Cout, H, W)
        # 1x1-conv operands are bf16 on the MXU -> compare at bf16-level tolerance
        # (still far tighter than any structural error would produce).
        if not bool(jnp.allclose(out, ref, atol=5e-2, rtol=5e-2)):
            raise AssertionError("Pallas MV4Block does not match reference")

    print("KERNEL_OK")
</pallas_src>

<mosaic_0001>
module attributes {stable_mosaic.version = 11 : i64} {
  func.func @_mv4_kernel(%arg0: i32, %arg1: memref<1x8x256xf32, #tpu.memory_space<vmem>>, %arg2: memref<32x8xbf16, #tpu.memory_space<vmem>>, %arg3: memref<32x1xf32, #tpu.memory_space<vmem>>, %arg4: memref<32x9xf32, #tpu.memory_space<vmem>>, %arg5: memref<32x1xf32, #tpu.memory_space<vmem>>, %arg6: memref<9x256xf32, #tpu.memory_space<vmem>>, %arg7: memref<32x8xf32, #tpu.memory_space<vmem>>, %arg8: memref<1x8xf32, #tpu.memory_space<vmem>>, %arg9: memref<8x32xf32, #tpu.memory_space<vmem>>, %arg10: memref<1x32xf32, #tpu.memory_space<vmem>>, %arg11: memref<8x32xf32, #tpu.memory_space<vmem>>, %arg12: memref<8x1xf32, #tpu.memory_space<vmem>>, %arg13: memref<1x8x256xf32, #tpu.memory_space<vmem>>) attributes {dimension_semantics = [#tpu.dimension_semantics<parallel>], iteration_bounds = array<i64: 2>, scalar_prefetch = 0 : i64, scratch_operands = 0 : i64, tpu.core_type = #tpu.core_type<tc>, window_params = [{transform_indices = @transform_0, window_bounds = array<i64: 1, 8, 256>}, {pipeline_mode = #tpu.pipeline_mode<synchronous>, transform_indices = @transform_1, window_bounds = array<i64: 32, 8>}, {pipeline_mode = #tpu.pipeline_mode<synchronous>, transform_indices = @transform_2, window_bounds = array<i64: 32, 1>}, {pipeline_mode = #tpu.pipeline_mode<synchronous>, transform_indices = @transform_3, window_bounds = array<i64: 32, 9>}, {pipeline_mode = #tpu.pipeline_mode<synchronous>, transform_indices = @transform_4, window_bounds = array<i64: 32, 1>}, {pipeline_mode = #tpu.pipeline_mode<synchronous>, transform_indices = @transform_5, window_bounds = array<i64: 9, 256>}, {pipeline_mode = #tpu.pipeline_mode<synchronous>, transform_indices = @transform_6, window_bounds = array<i64: 32, 8>}, {pipeline_mode = #tpu.pipeline_mode<synchronous>, transform_indices = @transform_7, window_bounds = array<i64: 1, 8>}, {pipeline_mode = #tpu.pipeline_mode<synchronous>, transform_indices = @transform_8, window_bounds = array<i64: 8, 32>}, {pipeline_mode = #tpu.pipeline_mode<synchronous>, transform_indices = @transform_9, window_bounds = array<i64: 1, 32>}, {pipeline_mode = #tpu.pipeline_mode<synchronous>, transform_indices = @transform_10, window_bounds = array<i64: 8, 32>}, {pipeline_mode = #tpu.pipeline_mode<synchronous>, transform_indices = @transform_11, window_bounds = array<i64: 8, 1>}, {transform_indices = @transform_12, window_bounds = array<i64: 1, 8, 256>}]} {
    %c0 = arith.constant 0 : index
    %c0_0 = arith.constant 0 : index
    %c0_1 = arith.constant 0 : index
    %0 = vector.load %arg1[%c0, %c0_0, %c0_1] : memref<1x8x256xf32, #tpu.memory_space<vmem>>, vector<1x8x256xf32>
    %1 = vector.shape_cast %0 : vector<1x8x256xf32> to vector<8x256xf32>
    %c0_2 = arith.constant 0 : index
    %c0_3 = arith.constant 0 : index
    %2 = vector.load %arg2[%c0_2, %c0_3] : memref<32x8xbf16, #tpu.memory_space<vmem>>, vector<32x8xbf16>
    %3 = arith.truncf %1 : vector<8x256xf32> to vector<8x256xbf16>
    %cst = arith.constant dense<0.000000e+00> : vector<32x256xf32>
    %4 = tpu.matmul %2, %3, %cst {dimension_numbers = #tpu.dot_dimension_numbers<[1], [0], [0], [1], [0, 0, 1, 1], [], []>} : vector<32x8xbf16>, vector<8x256xbf16>, vector<32x256xf32> -> vector<32x256xf32>
    %c0_4 = arith.constant 0 : index
    %c0_5 = arith.constant 0 : index
    %5 = vector.load %arg3[%c0_4, %c0_5] : memref<32x1xf32, #tpu.memory_space<vmem>>, vector<32x1xf32>
    %6 = vector.broadcast %5 : vector<32x1xf32> to vector<32x256xf32>
    %7 = arith.addf %4, %6 : vector<32x256xf32>
    %cst_6 = arith.constant 0.000000e+00 : f32
    %cst_7 = arith.constant 6.000000e+00 : f32
    %8 = vector.broadcast %cst_6 : f32 to vector<32x256xf32>
    %9 = arith.maximumf %8, %7 : vector<32x256xf32>
    %10 = vector.broadcast %cst_7 : f32 to vector<32x256xf32>
    %11 = arith.minimumf %10, %9 : vector<32x256xf32>
    %c0_8 = arith.constant 0 : index
    %c0_9 = arith.constant 0 : index
    %12 = vector.load %arg4[%c0_8, %c0_9] : memref<32x9xf32, #tpu.memory_space<vmem>>, vector<32x9xf32>
    %13 = vector.extract_strided_slice %12 {offsets = [0, 4], sizes = [32, 1], strides = [1, 1]} : vector<32x9xf32> to vector<32x1xf32>
    %14 = vector.broadcast %13 : vector<32x1xf32> to vector<32x256xf32>
    %15 = arith.mulf %11, %14 : vector<32x256xf32>
    %c17_i32 = arith.constant 17 : i32
    %16 = tpu.dynamic_rotate %11 by %c17_i32 dim 1 : vector<32x256xf32>, i32 -> vector<32x256xf32>
    %c0_10 = arith.constant 0 : index
    %c0_11 = arith.constant 0 : index
    %17 = vector.load %arg6[%c0_10, %c0_11] : memref<9x256xf32, #tpu.memory_space<vmem>>, vector<1x256xf32>
    %18 = vector.broadcast %17 : vector<1x256xf32> to vector<32x256xf32>
    %19 = arith.mulf %16, %18 : vector<32x256xf32>
    %20 = vector.extract_strided_slice %12 {offsets = [0, 0], sizes = [32, 1], strides = [1, 1]} : vector<32x9xf32> to vector<32x1xf32>
    %21 = vector.broadcast %20 : vector<32x1xf32> to vector<32x256xf32>
    %22 = arith.mulf %19, %21 : vector<32x256xf32>
    %23 = arith.addf %15, %22 : vector<32x256xf32>
    %c16_i32 = arith.constant 16 : i32
    %24 = tpu.dynamic_rotate %11 by %c16_i32 dim 1 : vector<32x256xf32>, i32 -> vector<32x256xf32>
    %c1 = arith.constant 1 : index
    %c0_12 = arith.constant 0 : index
    %25 = vector.load %arg6[%c1, %c0_12] : memref<9x256xf32, #tpu.memory_space<vmem>>, vector<1x256xf32>
    %26 = vector.broadcast %25 : vector<1x256xf32> to vector<32x256xf32>
    %27 = arith.mulf %24, %26 : vector<32x256xf32>
    %28 = vector.extract_strided_slice %12 {offsets = [0, 1], sizes = [32, 1], strides = [1, 1]} : vector<32x9xf32> to vector<32x1xf32>
    %29 = vector.broadcast %28 : vector<32x1xf32> to vector<32x256xf32>
    %30 = arith.mulf %27, %29 : vector<32x256xf32>
    %31 = arith.addf %23, %30 : vector<32x256xf32>
    %c15_i32 = arith.constant 15 : i32
    %32 = tpu.dynamic_rotate %11 by %c15_i32 dim 1 : vector<32x256xf32>, i32 -> vector<32x256xf32>
    %c2 = arith.constant 2 : index
    %c0_13 = arith.constant 0 : index
    %33 = vector.load %arg6[%c2, %c0_13] : memref<9x256xf32, #tpu.memory_space<vmem>>, vector<1x256xf32>
    %34 = vector.broadcast %33 : vector<1x256xf32> to vector<32x256xf32>
    %35 = arith.mulf %32, %34 : vector<32x256xf32>
    %36 = vector.extract_strided_slice %12 {offsets = [0, 2], sizes = [32, 1], strides = [1, 1]} : vector<32x9xf32> to vector<32x1xf32>
    %37 = vector.broadcast %36 : vector<32x1xf32> to vector<32x256xf32>
    %38 = arith.mulf %35, %37 : vector<32x256xf32>
    %39 = arith.addf %31, %38 : vector<32x256xf32>
    %c1_i32 = arith.constant 1 : i32
    %40 = tpu.dynamic_rotate %11 by %c1_i32 dim 1 : vector<32x256xf32>, i32 -> vector<32x256xf32>
    %c3 = arith.constant 3 : index
    %c0_14 = arith.constant 0 : index
    %41 = vector.load %arg6[%c3, %c0_14] : memref<9x256xf32, #tpu.memory_space<vmem>>, vector<1x256xf32>
    %42 = vector.broadcast %41 : vector<1x256xf32> to vector<32x256xf32>
    %43 = arith.mulf %40, %42 : vector<32x256xf32>
    %44 = vector.extract_strided_slice %12 {offsets = [0, 3], sizes = [32, 1], strides = [1, 1]} : vector<32x9xf32> to vector<32x1xf32>
    %45 = vector.broadcast %44 : vector<32x1xf32> to vector<32x256xf32>
    %46 = arith.mulf %43, %45 : vector<32x256xf32>
    %47 = arith.addf %39, %46 : vector<32x256xf32>
    %c255_i32 = arith.constant 255 : i32
    %48 = tpu.dynamic_rotate %11 by %c255_i32 dim 1 : vector<32x256xf32>, i32 -> vector<32x256xf32>
    %c5 = arith.constant 5 : index
    %c0_15 = arith.constant 0 : index
    %49 = vector.load %arg6[%c5, %c0_15] : memref<9x256xf32, #tpu.memory_space<vmem>>, vector<1x256xf32>
    %50 = vector.broadcast %49 : vector<1x256xf32> to vector<32x256xf32>
    %51 = arith.mulf %48, %50 : vector<32x256xf32>
    %52 = vector.extract_strided_slice %12 {offsets = [0, 5], sizes = [32, 1], strides = [1, 1]} : vector<32x9xf32> to vector<32x1xf32>
    %53 = vector.broadcast %52 : vector<32x1xf32> to vector<32x256xf32>
    %54 = arith.mulf %51, %53 : vector<32x256xf32>
    %55 = arith.addf %47, %54 : vector<32x256xf32>
    %c241_i32 = arith.constant 241 : i32
    %56 = tpu.dynamic_rotate %11 by %c241_i32 dim 1 : vector<32x256xf32>, i32 -> vector<32x256xf32>
    %c6 = arith.constant 6 : index
    %c0_16 = arith.constant 0 : index
    %57 = vector.load %arg6[%c6, %c0_16] : memref<9x256xf32, #tpu.memory_space<vmem>>, vector<1x256xf32>
    %58 = vector.broadcast %57 : vector<1x256xf32> to vector<32x256xf32>
    %59 = arith.mulf %56, %58 : vector<32x256xf32>
    %60 = vector.extract_strided_slice %12 {offsets = [0, 6], sizes = [32, 1], strides = [1, 1]} : vector<32x9xf32> to vector<32x1xf32>
    %61 = vector.broadcast %60 : vector<32x1xf32> to vector<32x256xf32>
    %62 = arith.mulf %59, %61 : vector<32x256xf32>
    %63 = arith.addf %55, %62 : vector<32x256xf32>
    %c240_i32 = arith.constant 240 : i32
    %64 = tpu.dynamic_rotate %11 by %c240_i32 dim 1 : vector<32x256xf32>, i32 -> vector<32x256xf32>
    %c7 = arith.constant 7 : index
    %c0_17 = arith.constant 0 : index
    %65 = vector.load %arg6[%c7, %c0_17] : memref<9x256xf32, #tpu.memory_space<vmem>>, vector<1x256xf32>
    %66 = vector.broadcast %65 : vector<1x256xf32> to vector<32x256xf32>
    %67 = arith.mulf %64, %66 : vector<32x256xf32>
    %68 = vector.extract_strided_slice %12 {offsets = [0, 7], sizes = [32, 1], strides = [1, 1]} : vector<32x9xf32> to vector<32x1xf32>
    %69 = vector.broadcast %68 : vector<32x1xf32> to vector<32x256xf32>
    %70 = arith.mulf %67, %69 : vector<32x256xf32>
    %71 = arith.addf %63, %70 : vector<32x256xf32>
    %c239_i32 = arith.constant 239 : i32
    %72 = tpu.dynamic_rotate %11 by %c239_i32 dim 1 : vector<32x256xf32>, i32 -> vector<32x256xf32>
    %c8 = arith.constant 8 : index
    %c0_18 = arith.constant 0 : index
    %73 = vector.load %arg6[%c8, %c0_18] : memref<9x256xf32, #tpu.memory_space<vmem>>, vector<1x256xf32>
    %74 = vector.broadcast %73 : vector<1x256xf32> to vector<32x256xf32>
    %75 = arith.mulf %72, %74 : vector<32x256xf32>
    %76 = vector.extract_strided_slice %12 {offsets = [0, 8], sizes = [32, 1], strides = [1, 1]} : vector<32x9xf32> to vector<32x1xf32>
    %77 = vector.broadcast %76 : vector<32x1xf32> to vector<32x256xf32>
    %78 = arith.mulf %75, %77 : vector<32x256xf32>
    %79 = arith.addf %71, %78 : vector<32x256xf32>
    %c0_19 = arith.constant 0 : index
    %c0_20 = arith.constant 0 : index
    %80 = vector.load %arg5[%c0_19, %c0_20] : memref<32x1xf32, #tpu.memory_space<vmem>>, vector<32x1xf32>
    %81 = vector.broadcast %80 : vector<32x1xf32> to vector<32x256xf32>
    %82 = arith.addf %79, %81 : vector<32x256xf32>
    %cst_21 = arith.constant 0.000000e+00 : f32
    %cst_22 = arith.constant 6.000000e+00 : f32
    %83 = vector.broadcast %cst_21 : f32 to vector<32x256xf32>
    %84 = arith.maximumf %83, %82 : vector<32x256xf32>
    %85 = vector.broadcast %cst_22 : f32 to vector<32x256xf32>
    %86 = arith.minimumf %85, %84 : vector<32x256xf32>
    %c0_23 = arith.constant 0 : index
    %c0_24 = arith.constant 0 : index
    %87 = vector.load %arg11[%c0_23, %c0_24] : memref<8x32xf32, #tpu.memory_space<vmem>>, vector<8x32xf32>
    %c4 = arith.constant 4 : index
    %c0_25 = arith.constant 0 : index
    %88 = vector.load %arg6[%c4, %c0_25] : memref<9x256xf32, #tpu.memory_space<vmem>>, vector<1x256xf32>
    %cst_26 = arith.constant dense<0.000000e+00> : vector<1x32xf32>
    %89 = tpu.matmul %88, %86, %cst_26 {dimension_numbers = #tpu.dot_dimension_numbers<[1], [1], [0], [0], [0, 0, 1, 0], [], []>} : vector<1x256xf32>, vector<32x256xf32>, vector<1x32xf32> -> vector<1x32xf32>
    %cst_27 = arith.constant 3.906250e-03 : f32
    %90 = vector.broadcast %cst_27 : f32 to vector<1x32xf32>
    %91 = arith.mulf %89, %90 : vector<1x32xf32>
    %c0_28 = arith.constant 0 : index
    %c0_29 = arith.constant 0 : index
    %92 = vector.load %arg7[%c0_28, %c0_29] : memref<32x8xf32, #tpu.memory_space<vmem>>, vector<32x8xf32>
    %cst_30 = arith.constant dense<0.000000e+00> : vector<1x8xf32>
    %93 = tpu.matmul %91, %92, %cst_30 {dimension_numbers = #tpu.dot_dimension_numbers<[1], [0], [0], [1], [0, 0, 1, 1], [], []>} : vector<1x32xf32>, vector<32x8xf32>, vector<1x8xf32> -> vector<1x8xf32>
    %c0_31 = arith.constant 0 : index
    %c0_32 = arith.constant 0 : index
    %94 = vector.load %arg8[%c0_31, %c0_32] : memref<1x8xf32, #tpu.memory_space<vmem>>, vector<1x8xf32>
    %95 = arith.addf %93, %94 : vector<1x8xf32>
    %cst_33 = arith.constant 0.000000e+00 : f32
    %96 = vector.broadcast %cst_33 : f32 to vector<1x8xf32>
    %97 = arith.maximumf %95, %96 : vector<1x8xf32>
    %c0_34 = arith.constant 0 : index
    %c0_35 = arith.constant 0 : index
    %98 = vector.load %arg9[%c0_34, %c0_35] : memref<8x32xf32, #tpu.memory_space<vmem>>, vector<8x32xf32>
    %cst_36 = arith.constant dense<0.000000e+00> : vector<1x32xf32>
    %99 = tpu.matmul %97, %98, %cst_36 {dimension_numbers = #tpu.dot_dimension_numbers<[1], [0], [0], [1], [0, 0, 1, 1], [], []>} : vector<1x8xf32>, vector<8x32xf32>, vector<1x32xf32> -> vector<1x32xf32>
    %c0_37 = arith.constant 0 : index
    %c0_38 = arith.constant 0 : index
    %100 = vector.load %arg10[%c0_37, %c0_38] : memref<1x32xf32, #tpu.memory_space<vmem>>, vector<1x32xf32>
    %101 = arith.addf %99, %100 : vector<1x32xf32>
    %102 = arith.negf %101 : vector<1x32xf32>
    %103 = math.exp %102 : vector<1x32xf32>
    %cst_39 = arith.constant 1.000000e+00 : f32
    %104 = vector.broadcast %cst_39 : f32 to vector<1x32xf32>
    %105 = arith.addf %104, %103 : vector<1x32xf32>
    %106 = arith.divf %104, %105 : vector<1x32xf32>
    %107 = vector.broadcast %106 : vector<1x32xf32> to vector<8x32xf32>
    %108 = arith.mulf %87, %107 : vector<8x32xf32>
    %109 = arith.truncf %108 : vector<8x32xf32> to vector<8x32xbf16>
    %110 = arith.truncf %86 : vector<32x256xf32> to vector<32x256xbf16>
    %cst_40 = arith.constant dense<0.000000e+00> : vector<8x256xf32>
    %111 = tpu.matmul %109, %110, %cst_40 {dimension_numbers = #tpu.dot_dimension_numbers<[1], [0], [0], [1], [0, 0, 1, 1], [], []>} : vector<8x32xbf16>, vector<32x256xbf16>, vector<8x256xf32> -> vector<8x256xf32>
    %c0_41 = arith.constant 0 : index
    %c0_42 = arith.constant 0 : index
    %112 = vector.load %arg12[%c0_41, %c0_42] : memref<8x1xf32, #tpu.memory_space<vmem>>, vector<8x1xf32>
    %113 = vector.broadcast %112 : vector<8x1xf32> to vector<8x256xf32>
    %114 = arith.addf %111, %113 : vector<8x256xf32>
    %115 = arith.addf %114, %1 : vector<8x256xf32>
    %c0_43 = arith.constant 0 : index
    %c0_44 = arith.constant 0 : index
    %c0_45 = arith.constant 0 : index
    %116 = vector.load %arg13[%c0_43, %c0_44, %c0_45] : memref<1x8x256xf32, #tpu.memory_space<vmem>>, vector<1x8x256xf32>
    %117 = vector.shape_cast %116 : vector<1x8x256xf32> to vector<8x256xf32>
    %118 = vector.shape_cast %115 : vector<8x256xf32> to vector<1x8x256xf32>
    tpu.vector_store %arg13[%c0_43, %c0_44, %c0_45], %118 {strides = array<i32>} : memref<1x8x256xf32, #tpu.memory_space<vmem>>, vector<1x8x256xf32>,
    return
  }
  func.func @transform_0(%arg0: i32) -> (i32, i32, i32) {
    %c0_i32 = arith.constant 0 : i32
    %c0_i32_0 = arith.constant 0 : i32
    %c0_i32_1 = arith.constant 0 : i32
    return %arg0, %c0_i32, %c0_i32_0 : i32, i32, i32
  }
  func.func @transform_1(%arg0: i32) -> (i32, i32) {
    %c0_i32 = arith.constant 0 : i32
    %c0_i32_0 = arith.constant 0 : i32
    %c0_i32_1 = arith.constant 0 : i32
    return %c0_i32, %c0_i32_0 : i32, i32
  }
  func.func @transform_2(%arg0: i32) -> (i32, i32) {
    %c0_i32 = arith.constant 0 : i32
    %c0_i32_0 = arith.constant 0 : i32
    %c0_i32_1 = arith.constant 0 : i32
    return %c0_i32, %c0_i32_0 : i32, i32
  }
  func.func @transform_3(%arg0: i32) -> (i32, i32) {
    %c0_i32 = arith.constant 0 : i32
    %c0_i32_0 = arith.constant 0 : i32
    %c0_i32_1 = arith.constant 0 : i32
    return %c0_i32, %c0_i32_0 : i32, i32
  }
  func.func @transform_4(%arg0: i32) -> (i32, i32) {
    %c0_i32 = arith.constant 0 : i32
    %c0_i32_0 = arith.constant 0 : i32
    %c0_i32_1 = arith.constant 0 : i32
    return %c0_i32, %c0_i32_0 : i32, i32
  }
  func.func @transform_5(%arg0: i32) -> (i32, i32) {
    %c0_i32 = arith.constant 0 : i32
    %c0_i32_0 = arith.constant 0 : i32
    %c0_i32_1 = arith.constant 0 : i32
    return %c0_i32, %c0_i32_0 : i32, i32
  }
  func.func @transform_6(%arg0: i32) -> (i32, i32) {
    %c0_i32 = arith.constant 0 : i32
    %c0_i32_0 = arith.constant 0 : i32
    %c0_i32_1 = arith.constant 0 : i32
    return %c0_i32, %c0_i32_0 : i32, i32
  }
  func.func @transform_7(%arg0: i32) -> (i32, i32) {
    %c0_i32 = arith.constant 0 : i32
    %c0_i32_0 = arith.constant 0 : i32
    %c0_i32_1 = arith.constant 0 : i32
    return %c0_i32, %c0_i32_0 : i32, i32
  }
  func.func @transform_8(%arg0: i32) -> (i32, i32) {
    %c0_i32 = arith.constant 0 : i32
    %c0_i32_0 = arith.constant 0 : i32
    %c0_i32_1 = arith.constant 0 : i32
    return %c0_i32, %c0_i32_0 : i32, i32
  }
  func.func @transform_9(%arg0: i32) -> (i32, i32) {
    %c0_i32 = arith.constant 0 : i32
    %c0_i32_0 = arith.constant 0 : i32
    %c0_i32_1 = arith.constant 0 : i32
    return %c0_i32, %c0_i32_0 : i32, i32
  }
  func.func @transform_10(%arg0: i32) -> (i32, i32) {
    %c0_i32 = arith.constant 0 : i32
    %c0_i32_0 = arith.constant 0 : i32
    %c0_i32_1 = arith.constant 0 : i32
    return %c0_i32, %c0_i32_0 : i32, i32
  }
  func.func @transform_11(%arg0: i32) -> (i32, i32) {
    %c0_i32 = arith.constant 0 : i32
    %c0_i32_0 = arith.constant 0 : i32
    %c0_i32_1 = arith.constant 0 : i32
    return %c0_i32, %c0_i32_0 : i32, i32
  }
  func.func @transform_12(%arg0: i32) -> (i32, i32, i32) {
    %c0_i32 = arith.constant 0 : i32
    %c0_i32_0 = arith.constant 0 : i32
    %c0_i32_1 = arith.constant 0 : i32
    return %arg0, %c0_i32, %c0_i32_0 : i32, i32, i32
  }
}

</mosaic_0001>

<llo_original>
// kernel: tpu_custom_call.1
$region0: #{tpu_custom_call.1}
  #allocation0 [shape = 'u32[]', space=smem, size = 0x4, offset = 0x4, fixed_abs, tag = 'smem constant byte address 0x4 - core index']
  #allocation1 [shape = 'u32[144,128]{1,0:T(1,128)}', space=vmem, size = 0x12000, scoped, tag = 'internal scratch']
  %s0 = inlined_call_operand.vmem [shape: f32[2,8,256], index: 0, kind: input, shape index: {}]
  %s1 = inlined_call_operand.vmem [shape: bf16[32,8], index: 1, kind: input, shape index: {}]
  %s2 = inlined_call_operand.vmem [shape: f32[32,1], index: 2, kind: input, shape index: {}]
  %s3 = inlined_call_operand.vmem [shape: f32[32,9], index: 3, kind: input, shape index: {}]
  %s4 = inlined_call_operand.vmem [shape: f32[32,1], index: 4, kind: input, shape index: {}]
  %s5 = inlined_call_operand.vmem [shape: f32[9,256], index: 5, kind: input, shape index: {}]
  %s6 = inlined_call_operand.vmem [shape: f32[32,8], index: 6, kind: input, shape index: {}]
  %s7 = inlined_call_operand.vmem [shape: f32[1,8], index: 7, kind: input, shape index: {}]
  %s8 = inlined_call_operand.vmem [shape: f32[8,32], index: 8, kind: input, shape index: {}]
  %s9 = inlined_call_operand.vmem [shape: f32[1,32], index: 9, kind: input, shape index: {}]
  %s10 = inlined_call_operand.vmem [shape: f32[8,32], index: 10, kind: input, shape index: {}]
  %s11 = inlined_call_operand.vmem [shape: f32[8,1], index: 11, kind: input, shape index: {}]
  %s12 = inlined_call_operand.hbm [shape: f32[2,8,256], index: 12, kind: output, shape index: {}]
  %s13 = sld [smem:[#allocation0]]
  $region81: #{tpu_custom_call.1} parent=0
    _
  %s15 = ssub.s32 1, %s13
  %s16 = scalar_select 0, %s15, %s13
  $region1: #{tpu_custom_call.1} parent=0
    #allocation2 [shape = 'u8[16384]{0}', space=vmem, size = 0x4000, scoped, tag = 'output window, operand 0']
    #allocation3 [shape = 's32[2]{0}', space=sflag, size = 0x8, scoped, tag = 'scoped memory for tpu_custom_call.1']
    %17 = vsyncpa [#allocation3], 0
    %s18 = scalar_lea.sflag [#allocation3], 1
    %19 = vsyncpa %s18, 0
    loop: start=0, step=1, limit=4
    $region2: #{tpu_custom_call.1} parent=1 // loop_pre_header
      _
    $region3: #{tpu_custom_call.1} parent=1 // loop_header
      %s21 = sphi 0, %s25
      %p22 = scmp.ge.s32.totalorder %s21, 4
      %s31 = sphi 0, %s33
      %s34 = sphi 0, %s31
      %s35 = sphi 0, %s34
      %s51 = sphi 0, %s35
      %s55 = sphi 0, %s55
      %s57 = sphi 0, %s55
      %s58 = sphi 0, %s57
      %s72 = sphi 0, %s58
      %s76 = sphi 0, %s76
      %s78 = sphi 0, %s76
      %s79 = sphi 0, %s78
      %s93 = sphi 0, %s79
      %s97 = sphi 0, %s97
      %s99 = sphi 0, %s97
      %s100 = sphi 0, %s99
      %s114 = sphi 0, %s100
      %s118 = sphi 0, %s118
      %s120 = sphi 0, %s118
      %s121 = sphi 0, %s120
      %s135 = sphi 0, %s121
      %s139 = sphi 0, %s139
      %s141 = sphi 0, %s139
      %s142 = sphi 0, %s141
      %s156 = sphi 0, %s142
      %s160 = sphi 0, %s160
      %s162 = sphi 0, %s160
      %s163 = sphi 0, %s162
      %s177 = sphi 0, %s163
      %s181 = sphi 0, %s181
      %s183 = sphi 0, %s181
      %s184 = sphi 0, %s183
      %s198 = sphi 0, %s184
      %s202 = sphi 0, %s202
      %s204 = sphi 0, %s202
      %s205 = sphi 0, %s204
      %s219 = sphi 0, %s205
      %s223 = sphi 0, %s223
      %s225 = sphi 0, %s223
      %s226 = sphi 0, %s225
      %s240 = sphi 0, %s226
      %s244 = sphi 0, %s244
      %s246 = sphi 0, %s244
      %s247 = sphi 0, %s246
      %s261 = sphi 0, %s247
      %s265 = sphi 0, %s265
      %s267 = sphi 0, %s265
      %s268 = sphi 0, %s267
      %s282 = sphi 0, %s268
      %s288 = sphi 0, %s290
      %s291 = sphi 0, %s288
      %s292 = sphi 0, %s291
      %s308 = sphi 0, %s292
    $region4: #{tpu_custom_call.1} parent=1 // loop_header_branch
      %24 = sbr.rel (%p22) target = $region8
    $region5: #{tpu_custom_call.1} parent=1 // loop_body
      %s26 = ssub.s32 %s21, 1
      %s27 = ssub.s32 %s21, 2
      %s28 = sadd.s32 %s21, 1
      %s29 = ssub.s32 %s21, %s28
      %p30 = scmp.eq.s32.totalorder %s29, 0
      %s32 = sadd.s32 %s31, 1
      %s33 = scalar_select %p30, %s31, %s32
      %p36 = pneg %p30
      %p37 = scmp.eq.s32.totalorder %s21, 1
      %p38 = por %p36, %p37
      %p39 = scmp.ne.s32.totalorder %s31, %s34
      %p40 = scmp.eq.s32.totalorder %s21, 0
      %p41 = por %p39, %p40
      %p42 = scmp.ne.s32.totalorder %s31, %s34
      %p43 = scmp.eq.s32.totalorder %s26, 1
      %p44 = por %p42, %p43
      %p45 = scmp.ne.s32.totalorder %s34, %s35
      %p46 = scmp.eq.s32.totalorder %s26, 0
      %p47 = por %p45, %p46
      %p48 = scmp.ne.s32.totalorder %s34, %s35
      %p49 = scmp.eq.s32.totalorder %s27, 1
      %p50 = por %p48, %p49
      %p52 = scmp.ne.s32.totalorder %s35, %s51
      %p53 = scmp.eq.s32.totalorder %s27, 0
      %p54 = por %p52, %p53
      %s56 = sadd.s32 %s55, 1
      %p59 = scmp.eq.s32.totalorder %s21, 1
      %p60 = scmp.ne.s32.totalorder %s55, %s57
      %p61 = scmp.eq.s32.totalorder %s21, 0
      %p62 = por %p60, %p61
      %p63 = scmp.ne.s32.totalorder %s55, %s57
      %p64 = scmp.eq.s32.totalorder %s26, 1
      %p65 = por %p63, %p64
      %p66 = scmp.ne.s32.totalorder %s57, %s58
      %p67 = scmp.eq.s32.totalorder %s26, 0
      %p68 = por %p66, %p67
      %p69 = scmp.ne.s32.totalorder %s57, %s58
      %p70 = scmp.eq.s32.totalorder %s27, 1
      %p71 = por %p69, %p70
      %p73 = scmp.ne.s32.totalorder %s58, %s72
      %p74 = scmp.eq.s32.totalorder %s27, 0
      %p75 = por %p73, %p74
      %s77 = sadd.s32 %s76, 1
      %p80 = scmp.eq.s32.totalorder %s21, 1
      %p81 = scmp.ne.s32.totalorder %s76, %s78
      %p82 = scmp.eq.s32.totalorder %s21, 0
      %p83 = por %p81, %p82
      %p84 = scmp.ne.s32.totalorder %s76, %s78
      %p85 = scmp.eq.s32.totalorder %s26, 1
      %p86 = por %p84, %p85
      %p87 = scmp.ne.s32.totalorder %s78, %s79
      %p88 = scmp.eq.s32.totalorder %s26, 0
      %p89 = por %p87, %p88
      %p90 = scmp.ne.s32.totalorder %s78, %s79
      %p91 = scmp.eq.s32.totalorder %s27, 1
      %p92 = por %p90, %p91
      %p94 = scmp.ne.s32.totalorder %s79, %s93
      %p95 = scmp.eq.s32.totalorder %s27, 0
      %p96 = por %p94, %p95
      %s98 = sadd.s32 %s97, 1
      %p101 = scmp.eq.s32.totalorder %s21, 1
      %p102 = scmp.ne.s32.totalorder %s97, %s99
      %p103 = scmp.eq.s32.totalorder %s21, 0
      %p104 = por %p102, %p103
      %p105 = scmp.ne.s32.totalorder %s97, %s99
      %p106 = scmp.eq.s32.totalorder %s26, 1
      %p107 = por %p105, %p106
      %p108 = scmp.ne.s32.totalorder %s99, %s100
      %p109 = scmp.eq.s32.totalorder %s26, 0
      %p110 = por %p108, %p109
      %p111 = scmp.ne.s32.totalorder %s99, %s100
      %p112 = scmp.eq.s32.totalorder %s27, 1
      %p113 = por %p111, %p112
      %p115 = scmp.ne.s32.totalorder %s100, %s114
      %p116 = scmp.eq.s32.totalorder %s27, 0
      %p117 = por %p115, %p116
      %s119 = sadd.s32 %s118, 1
      %p122 = scmp.eq.s32.totalorder %s21, 1
      %p123 = scmp.ne.s32.totalorder %s118, %s120
      %p124 = scmp.eq.s32.totalorder %s21, 0
      %p125 = por %p123, %p124
      %p126 = scmp.ne.s32.totalorder %s118, %s120
      %p127 = scmp.eq.s32.totalorder %s26, 1
      %p128 = por %p126, %p127
      %p129 = scmp.ne.s32.totalorder %s120, %s121
      %p130 = scmp.eq.s32.totalorder %s26, 0
      %p131 = por %p129, %p130
      %p132 = scmp.ne.s32.totalorder %s120, %s121
      %p133 = scmp.eq.s32.totalorder %s27, 1
      %p134 = por %p132, %p133
      %p136 = scmp.ne.s32.totalorder %s121, %s135
      %p137 = scmp.eq.s32.totalorder %s27, 0
      %p138 = por %p136, %p137
      %s140 = sadd.s32 %s139, 1
      %p143 = scmp.eq.s32.totalorder %s21, 1
      %p144 = scmp.ne.s32.totalorder %s139, %s141
      %p145 = scmp.eq.s32.totalorder %s21, 0
      %p146 = por %p144, %p145
      %p147 = scmp.ne.s32.totalorder %s139, %s141
      %p148 = scmp.eq.s32.totalorder %s26, 1
      %p149 = por %p147, %p148
      %p150 = scmp.ne.s32.totalorder %s141, %s142
      %p151 = scmp.eq.s32.totalorder %s26, 0
      %p152 = por %p150, %p151
      %p153 = scmp.ne.s32.totalorder %s141, %s142
      %p154 = scmp.eq.s32.totalorder %s27, 1
      %p155 = por %p153, %p154
      %p157 = scmp.ne.s32.totalorder %s142, %s156
      %p158 = scmp.eq.s32.totalorder %s27, 0
      %p159 = por %p157, %p158
      %s161 = sadd.s32 %s160, 1
      %p164 = scmp.eq.s32.totalorder %s21, 1
      %p165 = scmp.ne.s32.totalorder %s160, %s162
      %p166 = scmp.eq.s32.totalorder %s21, 0
      %p167 = por %p165, %p166
      %p168 = scmp.ne.s32.totalorder %s160, %s162
      %p169 = scmp.eq.s32.totalorder %s26, 1
      %p170 = por %p168, %p169
      %p171 = scmp.ne.s32.totalorder %s162, %s163
      %p172 = scmp.eq.s32.totalorder %s26, 0
      %p173 = por %p171, %p172
      %p174 = scmp.ne.s32.totalorder %s162, %s163
      %p175 = scmp.eq.s32.totalorder %s27, 1
      %p176 = por %p174, %p175
      %p178 = scmp.ne.s32.totalorder %s163, %s177
      %p179 = scmp.eq.s32.totalorder %s27, 0
      %p180 = por %p178, %p179
      %s182 = sadd.s32 %s181, 1
      %p185 = scmp.eq.s32.totalorder %s21, 1
      %p186 = scmp.ne.s32.totalorder %s181, %s183
      %p187 = scmp.eq.s32.totalorder %s21, 0
      %p188 = por %p186, %p187
      %p189 = scmp.ne.s32.totalorder %s181, %s183
      %p190 = scmp.eq.s32.totalorder %s26, 1
      %p191 = por %p189, %p190
      %p192 = scmp.ne.s32.totalorder %s183, %s184
      %p193 = scmp.eq.s32.totalorder %s26, 0
      %p194 = por %p192, %p193
      %p195 = scmp.ne.s32.totalorder %s183, %s184
      %p196 = scmp.eq.s32.totalorder %s27, 1
      %p197 = por %p195, %p196
      %p199 = scmp.ne.s32.totalorder %s184, %s198
      %p200 = scmp.eq.s32.totalorder %s27, 0
      %p201 = por %p199, %p200
      %s203 = sadd.s32 %s202, 1
      %p206 = scmp.eq.s32.totalorder %s21, 1
      %p207 = scmp.ne.s32.totalorder %s202, %s204
      %p208 = scmp.eq.s32.totalorder %s21, 0
      %p209 = por %p207, %p208
      %p210 = scmp.ne.s32.totalorder %s202, %s204
      %p211 = scmp.eq.s32.totalorder %s26, 1
      %p212 = por %p210, %p211
      %p213 = scmp.ne.s32.totalorder %s204, %s205
      %p214 = scmp.eq.s32.totalorder %s26, 0
      %p215 = por %p213, %p214
      %p216 = scmp.ne.s32.totalorder %s204, %s205
      %p217 = scmp.eq.s32.totalorder %s27, 1
      %p218 = por %p216, %p217
      %p220 = scmp.ne.s32.totalorder %s205, %s219
      %p221 = scmp.eq.s32.totalorder %s27, 0
      %p222 = por %p220, %p221
      %s224 = sadd.s32 %s223, 1
      %p227 = scmp.eq.s32.totalorder %s21, 1
      %p228 = scmp.ne.s32.totalorder %s223, %s225
      %p229 = scmp.eq.s32.totalorder %s21, 0
      %p230 = por %p228, %p229
      %p231 = scmp.ne.s32.totalorder %s223, %s225
      %p232 = scmp.eq.s32.totalorder %s26, 1
      %p233 = por %p231, %p232
      %p234 = scmp.ne.s32.totalorder %s225, %s226
      %p235 = scmp.eq.s32.totalorder %s26, 0
      %p236 = por %p234, %p235
      %p237 = scmp.ne.s32.totalorder %s225, %s226
      %p238 = scmp.eq.s32.totalorder %s27, 1
      %p239 = por %p237, %p238
      %p241 = scmp.ne.s32.totalorder %s226, %s240
      %p242 = scmp.eq.s32.totalorder %s27, 0
      %p243 = por %p241, %p242
      %s245 = sadd.s32 %s244, 1
      %p248 = scmp.eq.s32.totalorder %s21, 1
      %p249 = scmp.ne.s32.totalorder %s244, %s246
      %p250 = scmp.eq.s32.totalorder %s21, 0
      %p251 = por %p249, %p250
      %p252 = scmp.ne.s32.totalorder %s244, %s246
      %p253 = scmp.eq.s32.totalorder %s26, 1
      %p254 = por %p252, %p253
      %p255 = scmp.ne.s32.totalorder %s246, %s247
      %p256 = scmp.eq.s32.totalorder %s26, 0
      %p257 = por %p255, %p256
      %p258 = scmp.ne.s32.totalorder %s246, %s247
      %p259 = scmp.eq.s32.totalorder %s27, 1
      %p260 = por %p258, %p259
      %p262 = scmp.ne.s32.totalorder %s247, %s261
      %p263 = scmp.eq.s32.totalorder %s27, 0
      %p264 = por %p262, %p263
      %s266 = sadd.s32 %s265, 1
      %p269 = scmp.eq.s32.totalorder %s21, 1
      %p270 = scmp.ne.s32.totalorder %s265, %s267
      %p271 = scmp.eq.s32.totalorder %s21, 0
      %p272 = por %p270, %p271
      %p273 = scmp.ne.s32.totalorder %s265, %s267
      %p274 = scmp.eq.s32.totalorder %s26, 1
      %p275 = por %p273, %p274
      %p276 = scmp.ne.s32.totalorder %s267, %s268
      %p277 = scmp.eq.s32.totalorder %s26, 0
      %p278 = por %p276, %p277
      %p279 = scmp.ne.s32.totalorder %s267, %s268
      %p280 = scmp.eq.s32.totalorder %s27, 1
      %p281 = por %p279, %p280
      %p283 = scmp.ne.s32.totalorder %s268, %s282
      %p284 = scmp.eq.s32.totalorder %s27, 0
      %p285 = por %p283, %p284
      %s286 = ssub.s32 %s21, %s28
      %p287 = scmp.eq.s32.totalorder %s286, 0
      %s289 = sadd.s32 %s288, 1
      %s290 = scalar_select %p287, %s288, %s289
      %p293 = pneg %p287
      %p294 = scmp.eq.s32.totalorder %s21, 1
      %p295 = por %p293, %p294
      %p296 = scmp.ne.s32.totalorder %s288, %s291
      %p297 = scmp.eq.s32.totalorder %s21, 0
      %p298 = por %p296, %p297
      %p299 = scmp.ne.s32.totalorder %s288, %s291
      %p300 = scmp.eq.s32.totalorder %s26, 1
      %p301 = por %p299, %p300
      %p302 = scmp.ne.s32.totalorder %s291, %s292
      %p303 = scmp.eq.s32.totalorder %s26, 0
      %p304 = por %p302, %p303
      %p305 = scmp.ne.s32.totalorder %s291, %s292
      %p306 = scmp.eq.s32.totalorder %s27, 1
      %p307 = por %p305, %p306
      %p309 = scmp.ne.s32.totalorder %s292, %s308
      %p310 = scmp.eq.s32.totalorder %s27, 0
      %p311 = por %p309, %p310
      %p312 = scmp.le.s32.totalorder 1, %s21
      %p313 = scmp.lt.s32.totalorder %s21, 3
      %p314 = pnand %p312, %p313
      %p315 = pneg %p314
      // Predicated region
      $region9: #{tpu_custom_call.1} parent=5 // pred_check
        _
      $region10: #{tpu_custom_call.1} parent=5 // pred_check_branch
        %317 = sbr.rel (%p314) target = $region12
      $region11: #{tpu_custom_call.1} parent=5 // pred_region
        %s318 = ssub.s32 %s21, 1
        // Predicated region
        $region13: #{tpu_custom_call.1} parent=11 // pred_check
          %p319 = pneg %p68
        $region14: #{tpu_custom_call.1} parent=11 // pred_check_branch
          %321 = sbr.rel (%p319) target = $region16
        $region15: #{tpu_custom_call.1} parent=11 // pred_region
          _
        $region16: #{tpu_custom_call.1} parent=11 // pred_fallthru
          _
        // Predicated region
        $region17: #{tpu_custom_call.1} parent=11 // pred_check
          %p322 = pneg %p89
        $region18: #{tpu_custom_call.1} parent=11 // pred_check_branch
          %324 = sbr.rel (%p322) target = $region20
        $region19: #{tpu_custom_call.1} parent=11 // pred_region
          _
        $region20: #{tpu_custom_call.1} parent=11 // pred_fallthru
          _
        // Predicated region
        $region21: #{tpu_custom_call.1} parent=11 // pred_check
          %p325 = pneg %p110
        $region22: #{tpu_custom_call.1} parent=11 // pred_check_branch
          %327 = sbr.rel (%p325) target = $region24
        $region23: #{tpu_custom_call.1} parent=11 // pred_region
          _
        $region24: #{tpu_custom_call.1} parent=11 // pred_fallthru
          _
        // Predicated region
        $region25: #{tpu_custom_call.1} parent=11 // pred_check
          %p328 = pneg %p131
        $region26: #{tpu_custom_call.1} parent=11 // pred_check_branch
          %330 = sbr.rel (%p328) target = $region28
        $region27: #{tpu_custom_call.1} parent=11 // pred_region
          _
        $region28: #{tpu_custom_call.1} parent=11 // pred_fallthru
          _
        // Predicated region
        $region29: #{tpu_custom_call.1} parent=11 // pred_check
          %p331 = pneg %p152
        $region30: #{tpu_custom_call.1} parent=11 // pred_check_branch
          %333 = sbr.rel (%p331) target = $region32
        $region31: #{tpu_custom_call.1} parent=11 // pred_region
          _
        $region32: #{tpu_custom_call.1} parent=11 // pred_fallthru
          _
        // Predicated region
        $region33: #{tpu_custom_call.1} parent=11 // pred_check
          %p334 = pneg %p173
        $region34: #{tpu_custom_call.1} parent=11 // pred_check_branch
          %336 = sbr.rel (%p334) target = $region36
        $region35: #{tpu_custom_call.1} parent=11 // pred_region
          _
        $region36: #{tpu_custom_call.1} parent=11 // pred_fallthru
          _
        // Predicated region
        $region37: #{tpu_custom_call.1} parent=11 // pred_check
          %p337 = pneg %p194
        $region38: #{tpu_custom_call.1} parent=11 // pred_check_branch
          %339 = sbr.rel (%p337) target = $region40
        $region39: #{tpu_custom_call.1} parent=11 // pred_region
          _
        $region40: #{tpu_custom_call.1} parent=11 // pred_fallthru
          _
        // Predicated region
        $region41: #{tpu_custom_call.1} parent=11 // pred_check
          %p340 = pneg %p215
        $region42: #{tpu_custom_call.1} parent=11 // pred_check_branch
          %342 = sbr.rel (%p340) target = $region44
        $region43: #{tpu_custom_call.1} parent=11 // pred_region
          _
        $region44: #{tpu_custom_call.1} parent=11 // pred_fallthru
          _
        // Predicated region
        $region45: #{tpu_custom_call.1} parent=11 // pred_check
          %p343 = pneg %p236
        $region46: #{tpu_custom_call.1} parent=11 // pred_check_branch
          %345 = sbr.rel (%p343) target = $region48
        $region47: #{tpu_custom_call.1} parent=11 // pred_region
          _
        $region48: #{tpu_custom_call.1} parent=11 // pred_fallthru
          _
        // Predicated region
        $region49: #{tpu_custom_call.1} parent=11 // pred_check
          %p346 = pneg %p257
        $region50: #{tpu_custom_call.1} parent=11 // pred_check_branch
          %348 = sbr.rel (%p346) target = $region52
        $region51: #{tpu_custom_call.1} parent=11 // pred_region
          _
        $region52: #{tpu_custom_call.1} parent=11 // pred_fallthru
          _
        // Predicated region
        $region53: #{tpu_custom_call.1} parent=11 // pred_check
          %p349 = pneg %p278
        $region54: #{tpu_custom_call.1} parent=11 // pred_check_branch
          %351 = sbr.rel (%p349) target = $region56
        $region55: #{tpu_custom_call.1} parent=11 // pred_region
          _
        $region56: #{tpu_custom_call.1} parent=11 // pred_fallthru
          _
      $region12: #{tpu_custom_call.1} parent=5 // pred_fallthru
        _
      %p352 = scmp.lt.s32.totalorder %s21, 2
      // Predicated region
      $region57: #{tpu_custom_call.1} parent=5 // pred_check
        %p353 = pneg %p352
      $region58: #{tpu_custom_call.1} parent=5 // pred_check_branch
        %355 = sbr.rel (%p353) target = $region60
      $region59: #{tpu_custom_call.1} parent=5 // pred_region
        // Predicated region
        $region61: #{tpu_custom_call.1} parent=59 // pred_check
          %p356 = pneg %p41
        $region62: #{tpu_custom_call.1} parent=59 // pred_check_branch
          %358 = sbr.rel (%p356) target = $region64
        $region63: #{tpu_custom_call.1} parent=59 // pred_region
          %p359 = scmp.lt.s32.totalorder %s21, 1
          %s360 = scalar_select %p359, %s21, 1
          %s361 = smul.addr %s360, 2
          %s362 = smul.addr %s361, 8
          %s363 = scalar_lea.vmem %s0, %s362
        $region64: #{tpu_custom_call.1} parent=59 // pred_fallthru
          _
      $region60: #{tpu_custom_call.1} parent=5 // pred_fallthru
        _
      %p364 = scmp.le.s32.totalorder 1, %s21
      %p365 = scmp.lt.s32.totalorder %s21, 3
      %p366 = pnand %p364, %p365
      %p367 = pneg %p366
      // Predicated region
      $region65: #{tpu_custom_call.1} parent=5 // pred_check
        _
      $region66: #{tpu_custom_call.1} parent=5 // pred_check_branch
        %369 = sbr.rel (%p366) target = $region68
      $region67: #{tpu_custom_call.1} parent=5 // pred_region
        %s370 = ssub.s32 %s21, 1
        %p371 = scmp.lt.s32.totalorder %s26, 1
        %s372 = scalar_select %p371, %s26, 1
        %s373 = smul.addr %s372, 2
        %s374 = smul.addr %s373, 8
        %s375 = scalar_lea.vmem %s0, %s374
        %p376 = pneg %p47
        %p377 = pneg %p44
        %p378 = pneg %p68
        %p379 = pneg %p65
        %p380 = pneg %p89
        %p381 = pneg %p86
        %p382 = pneg %p110
        %p383 = pneg %p107
        %p384 = pneg %p131
        %p385 = pneg %p128
        %p386 = pneg %p152
        %p387 = pneg %p149
        %p388 = pneg %p173
        %p389 = pneg %p170
        %p390 = pneg %p194
        %p391 = pneg %p191
        %p392 = pneg %p215
        %p393 = pneg %p212
        %p394 = pneg %p236
        %p395 = pneg %p233
        %p396 = pneg %p257
        %p397 = pneg %p254
        %p398 = pneg %p278
        %p399 = pneg %p275
        %p400 = pneg %p304
        %p401 = pneg %p301
        %s402 = sand.u32 %s291, 1
        %s403 = scalar_lea.sflag [#allocation3], %s402
        %s404 = sand.u32 %s291, 1
        %s405 = smul.addr %s404, 16
        %s406 = scalar_lea.vmem [#allocation2], %s405
        %p407 = scmp.lt.s32.totalorder %s26, 1
        %s408 = scalar_select %p407, %s26, 1
        %s409 = smul.addr %s408, 2
        %s410 = smul.addr %s409, 8
        %s411 = scalar_lea.vmem %s0, %s410
        %v413 = vld [vmem:[%s411] sm:$0xff]
        %v414 = vld [vmem:[%s411 + $0x8] sm:$0xff]
        %v415 = vld [vmem:[%s1] sm:$0xf]
        %v416 = vld [vmem:[%s1 + $0x4] sm:$0xf]
        %v417 = vld [vmem:[%s1 + $0x8] sm:$0xf]
        %v418 = vld [vmem:[%s1 + $0xc] sm:$0xf]
        %v419 = vpack.c.bf16 %v413, %v413
        %v420 = vpack.c.bf16 %v414, %v414
        %v421 = vld [vmem:[%s2] sm:$0xff]
        %v422 = vld [vmem:[%s2 + $0x8] sm:$0xff]
        %v423 = vld [vmem:[%s2 + $0x10] sm:$0xff]
        %v424 = vld [vmem:[%s2 + $0x18] sm:$0xff]
        %426 = vset.pattern.permute.xlu0 0
        %427 = vperm.xlu0 %426, %v421
        %v428 = vpop.permute.xlu0 %427
        %431 = vset.pattern.permute.xlu0 0
        %432 = vperm.xlu0 %431, %v422
        %v433 = vpop.permute.xlu0 %432
        %436 = vset.pattern.permute.xlu0 0
        %437 = vperm.xlu0 %436, %v423
        %v438 = vpop.permute.xlu0 %437
        %441 = vset.pattern.permute.xlu0 0
        %442 = vperm.xlu0 %441, %v424
        %v443 = vpop.permute.xlu0 %442
        %v449 = vunpack.c.l.b16 %v415
        %v450 = vunpack.c.l.b16 %v416
        %v451 = vunpack.c.l.b16 %v417
        %v452 = vunpack.c.l.b16 %v418
        %v453 = vpack.c.b16 %v450, %v449
        %v454 = vpack.c.b16 %v452, %v451
        %vm455 = vcmask 64512
        %v457 = vsel %vm455, %v453, 0
        %v460 = vsel %vm455, %v454, 0
        %vm462 = vcmask 1043456
        %v464 = vsel %vm462, %v419, 0
        %v467 = vsel %vm462, %v420, 0
        %469 = vmatprep.subr.bf16.mxu0 0
        %470 = vmatpush1.bf16.msra.mxu0 0
        %471 = vmatprep.subr.bf16.mxu0 0
        %472 = vmatpush1.bf16.msra.mxu0 0
        %473 = vmatprep.subr.bf16.mxu0 0
        %474 = vmatpush1.bf16.msra.mxu0 0
        %475 = vmatprep.subr.bf16.mxu0 0
        %476 = vmatpush1.bf16.msra.mxu0 0
        %477 = vmatprep.subr.bf16.mxu0 0
        %478 = vmatpush1.bf16.msra.mxu0 0
        %479 = vmatprep.subr.bf16.mxu0 0
        %480 = vmatpush1.bf16.msra.mxu0 0
        %481 = vmatprep.subr.bf16.mxu0 0
        %482 = vmatpush1.bf16.msra.mxu0 0
        %483 = vmatprep.subr.bf16.mxu0 %v467
        %484 = vmatpush1.bf16.msra.mxu0 %v464
        %485 = vmatprep.subr.bf16.mxu0 0
        %486 = vmatpush2.bf16.msra.mxu0 0
        %487 = vmatprep.subr.bf16.mxu0 0
        %488 = vmatpush2.bf16.msra.mxu0 0
        %489 = vmatprep.subr.bf16.mxu0 0
        %490 = vmatpush2.bf16.msra.mxu0 0
        %491 = vmatprep.subr.bf16.mxu0 0
        %492 = vmatpush2.bf16.msra.mxu0 0
        %493 = vmatprep.subr.bf16.mxu0 0
        %494 = vmatpush2.bf16.msra.mxu0 0
        %495 = vmatprep.subr.bf16.mxu0 0
        %496 = vmatpush2.bf16.msra.mxu0 0
        %497 = vmatprep.subr.bf16.mxu0 0
        %498 = vmatpush2.bf16.msra.mxu0 0
        %499 = vmatprep.subr.bf16.mxu0 0
        %500 = vmatpush2.bf16.msra.mxu0 0
        %501 = vmatprep.mubr.bf16.mxu0 0
        %502 = vmatmul.mubr.bf16.gmra.mxu0 %v457
        %v503 = vpop.f32.mrf.mxu0
        %v504 = vadd.f32 %v428, %v503
        %v505 = vpop.f32.mrf.mxu0
        %v506 = vadd.f32 %v428, %v505
        %v507 = vpop.f32.mrf.mxu0
        %v508 = vadd.f32 %v433, %v507
        %v509 = vpop.f32.mrf.mxu0
        %v510 = vadd.f32 %v433, %v509
        %511 = vmatprep.mubr.bf16.mxu0 0
        %512 = vmatmul.mubr.bf16.gmra.mxu0 %v460
        %v513 = vpop.f32.mrf.mxu0
        %v514 = vadd.f32 %v438, %v513
        %v515 = vpop.f32.mrf.mxu0
        %v516 = vadd.f32 %v438, %v515
        %v517 = vpop.f32.mrf.mxu0
        %v518 = vadd.f32 %v443, %v517
        %v519 = vpop.f32.mrf.mxu0
        %v520 = vadd.f32 %v443, %v519
        %521 = vdwg.mxu0
        %v522 = vmax.f32 %v504, 0.0
        %v523 = vmax.f32 %v506, 0.0
        %v524 = vmax.f32 %v508, 0.0
        %v525 = vmax.f32 %v510, 0.0
        %v526 = vmax.f32 %v514, 0.0
        %v527 = vmax.f32 %v516, 0.0
        %v528 = vmax.f32 %v518, 0.0
        %v529 = vmax.f32 %v520, 0.0
        %v530 = vmin.f32 %v522, 6.0
        %v531 = vmin.f32 %v523, 6.0
        %v532 = vmin.f32 %v524, 6.0
        %v533 = vmin.f32 %v525, 6.0
        %v534 = vmin.f32 %v526, 6.0
        %v535 = vmin.f32 %v527, 6.0
        %v536 = vmin.f32 %v528, 6.0
        %v537 = vmin.f32 %v529, 6.0
        %v538 = vld [vmem:[%s3] sm:$0xff]
        %v539 = vld [vmem:[%s3 + $0x8] sm:$0xff]
        %v540 = vld [vmem:[%s3 + $0x10] sm:$0xff]
        %v541 = vld [vmem:[%s3 + $0x18] sm:$0xff]
        %543 = vset.pattern.permute.xlu0 4
        %544 = vperm.xlu0 %543, %v538
        %v545 = vpop.permute.xlu0 %544
        %548 = vset.pattern.permute.xlu0 4
        %549 = vperm.xlu0 %548, %v539
        %v550 = vpop.permute.xlu0 %549
        %553 = vset.pattern.permute.xlu0 4
        %554 = vperm.xlu0 %553, %v540
        %v555 = vpop.permute.xlu0 %554
        %558 = vset.pattern.permute.xlu0 4
        %559 = vperm.xlu0 %558, %v541
        %v560 = vpop.permute.xlu0 %559
        %v562 = vmul.f32 %v530, %v545
        %v563 = vmul.f32 %v531, %v545
        %v564 = vmul.f32 %v532, %v550
        %v565 = vmul.f32 %v533, %v550
        %v566 = vmul.f32 %v534, %v555
        %v567 = vmul.f32 %v535, %v555
        %v568 = vmul.f32 %v536, %v560
        %v569 = vmul.f32 %v537, %v560
        %570 = vrot.lane.b32.xlu0 %v530, 17
        %v571 = vpop.permute.xlu0 %570
        %572 = vrot.lane.b32.xlu0 %v532, 17
        %v573 = vpop.permute.xlu0 %572
        %574 = vrot.lane.b32.xlu0 %v534, 17
        %v575 = vpop.permute.xlu0 %574
        %576 = vrot.lane.b32.xlu0 %v536, 17
        %v577 = vpop.permute.xlu0 %576
        %578 = vrot.lane.b32.xlu0 %v531, 17
        %v579 = vpop.permute.xlu0 %578
        %580 = vrot.lane.b32.xlu0 %v533, 17
        %v581 = vpop.permute.xlu0 %580
        %582 = vrot.lane.b32.xlu0 %v535, 17
        %v583 = vpop.permute.xlu0 %582
        %584 = vrot.lane.b32.xlu0 %v537, 17
        %v585 = vpop.permute.xlu0 %584
        %v586 = vlaneseq
        %v587 = vand.u32 %v586, 127
        %vm588 = vcmp.lt.s32.totalorder %v587, 17
        %v589 = vsel %vm588, %v571, %v579
        %v590 = vsel %vm588, %v573, %v581
        %v591 = vsel %vm588, %v575, %v583
        %v592 = vsel %vm588, %v577, %v585
        %v593 = vsel %vm588, %v579, %v571
        %v594 = vsel %vm588, %v581, %v573
        %v595 = vsel %vm588, %v583, %v575
        %v596 = vsel %vm588, %v585, %v577
        %v597 = vld [vmem:[%s5] ss:$8 sm:$0x3]
        %v599 = vlaneseq
        %v600 = vshrl.u32 %v599, 7
        %v601 = vsub.s32 0, %v600
        %v602 = vrot.slane %v597, %v601
        %v603 = vlaneseq
        %v604 = vshrl.u32 %v603, 7
        %v605 = vsub.s32 1, %v604
        %v606 = vrot.slane %v597, %v605
        %v609 = vmul.f32 %v593, %v602
        %v610 = vmul.f32 %v589, %v606
        %v611 = vmul.f32 %v594, %v602
        %v612 = vmul.f32 %v590, %v606
        %v613 = vmul.f32 %v595, %v602
        %v614 = vmul.f32 %v591, %v606
        %v615 = vmul.f32 %v596, %v602
        %v616 = vmul.f32 %v592, %v606
        %617 = vset.pattern.permute.xlu0 0
        %618 = vperm.xlu0 %617, %v538
        %v619 = vpop.permute.xlu0 %618
        %621 = vset.pattern.permute.xlu0 0
        %622 = vperm.xlu0 %621, %v539
        %v623 = vpop.permute.xlu0 %622
        %625 = vset.pattern.permute.xlu0 0
        %626 = vperm.xlu0 %625, %v540
        %v627 = vpop.permute.xlu0 %626
        %629 = vset.pattern.permute.xlu0 0
        %630 = vperm.xlu0 %629, %v541
        %v631 = vpop.permute.xlu0 %630
        %v633 = vmul.f32 %v609, %v619
        %v634 = vmul.f32 %v610, %v619
        %v635 = vmul.f32 %v611, %v623
        %v636 = vmul.f32 %v612, %v623
        %v637 = vmul.f32 %v613, %v627
        %v638 = vmul.f32 %v614, %v627
        %v639 = vmul.f32 %v615, %v631
        %v640 = vmul.f32 %v616, %v631
        %v641 = vadd.f32 %v562, %v633
        %v642 = vadd.f32 %v563, %v634
        %v643 = vadd.f32 %v564, %v635
        %v644 = vadd.f32 %v565, %v636
        %v645 = vadd.f32 %v566, %v637
        %v646 = vadd.f32 %v567, %v638
        %v647 = vadd.f32 %v568, %v639
        %v648 = vadd.f32 %v569, %v640
        %649 = vrot.lane.b32.xlu0 %v530, 16
        %v650 = vpop.permute.xlu0 %649
        %651 = vrot.lane.b32.xlu0 %v532, 16
        %v652 = vpop.permute.xlu0 %651
        %653 = vrot.lane.b32.xlu0 %v534, 16
        %v654 = vpop.permute.xlu0 %653
        %655 = vrot.lane.b32.xlu0 %v536, 16
        %v656 = vpop.permute.xlu0 %655
        %657 = vrot.lane.b32.xlu0 %v531, 16
        %v658 = vpop.permute.xlu0 %657
        %659 = vrot.lane.b32.xlu0 %v533, 16
        %v660 = vpop.permute.xlu0 %659
        %661 = vrot.lane.b32.xlu0 %v535, 16
        %v662 = vpop.permute.xlu0 %661
        %663 = vrot.lane.b32.xlu0 %v537, 16
        %v664 = vpop.permute.xlu0 %663
        %vm665 = vcmp.lt.s32.totalorder %v587, 16
        %v666 = vsel %vm665, %v650, %v658
        %v667 = vsel %vm665, %v652, %v660
        %v668 = vsel %vm665, %v654, %v662
        %v669 = vsel %vm665, %v656, %v664
        %v670 = vsel %vm665, %v658, %v650
        %v671 = vsel %vm665, %v660, %v652
        %v672 = vsel %vm665, %v662, %v654
        %v673 = vsel %vm665, %v664, %v656
        %s674 = scalar_lea.vmem %s5, 1
        %v675 = vld [vmem:[%s674] ss:$8 sm:$0x3]
        %v677 = vlaneseq
        %v678 = vshrl.u32 %v677, 7
        %v679 = vsub.s32 0, %v678
        %v680 = vrot.slane %v675, %v679
        %v681 = vlaneseq
        %v682 = vshrl.u32 %v681, 7
        %v683 = vsub.s32 1, %v682
        %v684 = vrot.slane %v675, %v683
        %v687 = vmul.f32 %v670, %v680
        %v688 = vmul.f32 %v666, %v684
        %v689 = vmul.f32 %v671, %v680
        %v690 = vmul.f32 %v667, %v684
        %v691 = vmul.f32 %v672, %v680
        %v692 = vmul.f32 %v668, %v684
        %v693 = vmul.f32 %v673, %v680
        %v694 = vmul.f32 %v669, %v684
        %695 = vset.pattern.permute.xlu0 1
        %696 = vperm.xlu0 %695, %v538
        %v697 = vpop.permute.xlu0 %696
        %699 = vset.pattern.permute.xlu0 1
        %700 = vperm.xlu0 %699, %v539
        %v701 = vpop.permute.xlu0 %700
        %703 = vset.pattern.permute.xlu0 1
        %704 = vperm.xlu0 %703, %v540
        %v705 = vpop.permute.xlu0 %704
        %707 = vset.pattern.permute.xlu0 1
        %708 = vperm.xlu0 %707, %v541
        %v709 = vpop.permute.xlu0 %708
        %v711 = vmul.f32 %v687, %v697
        %v712 = vmul.f32 %v688, %v697
        %v713 = vmul.f32 %v689, %v701
        %v714 = vmul.f32 %v690, %v701
        %v715 = vmul.f32 %v691, %v705
        %v716 = vmul.f32 %v692, %v705
        %v717 = vmul.f32 %v693, %v709
        %v718 = vmul.f32 %v694, %v709
        %v719 = vadd.f32 %v641, %v711
        %v720 = vadd.f32 %v642, %v712
        %v721 = vadd.f32 %v643, %v713
        %v722 = vadd.f32 %v644, %v714
        %v723 = vadd.f32 %v645, %v715
        %v724 = vadd.f32 %v646, %v716
        %v725 = vadd.f32 %v647, %v717
        %v726 = vadd.f32 %v648, %v718
        %727 = vrot.lane.b32.xlu0 %v530, 15
        %v728 = vpop.permute.xlu0 %727
        %729 = vrot.lane.b32.xlu0 %v532, 15
        %v730 = vpop.permute.xlu0 %729
        %731 = vrot.lane.b32.xlu0 %v534, 15
        %v732 = vpop.permute.xlu0 %731
        %733 = vrot.lane.b32.xlu0 %v536, 15
        %v734 = vpop.permute.xlu0 %733
        %735 = vrot.lane.b32.xlu0 %v531, 15
        %v736 = vpop.permute.xlu0 %735
        %737 = vrot.lane.b32.xlu0 %v533, 15
        %v738 = vpop.permute.xlu0 %737
        %739 = vrot.lane.b32.xlu0 %v535, 15
        %v740 = vpop.permute.xlu0 %739
        %741 = vrot.lane.b32.xlu0 %v537, 15
        %v742 = vpop.permute.xlu0 %741
        %vm743 = vcmp.lt.s32.totalorder %v587, 15
        %v744 = vsel %vm743, %v728, %v736
        %v745 = vsel %vm743, %v730, %v738
        %v746 = vsel %vm743, %v732, %v740
        %v747 = vsel %vm743, %v734, %v742
        %v748 = vsel %vm743, %v736, %v728
        %v749 = vsel %vm743, %v738, %v730
        %v750 = vsel %vm743, %v740, %v732
        %v751 = vsel %vm743, %v742, %v734
        %s752 = scalar_lea.vmem %s5, 2
        %v753 = vld [vmem:[%s752] ss:$8 sm:$0x3]
        %v755 = vlaneseq
        %v756 = vshrl.u32 %v755, 7
        %v757 = vsub.s32 0, %v756
        %v758 = vrot.slane %v753, %v757
        %v759 = vlaneseq
        %v760 = vshrl.u32 %v759, 7
        %v761 = vsub.s32 1, %v760
        %v762 = vrot.slane %v753, %v761
        %v765 = vmul.f32 %v748, %v758
        %v766 = vmul.f32 %v744, %v762
        %v767 = vmul.f32 %v749, %v758
        %v768 = vmul.f32 %v745, %v762
        %v769 = vmul.f32 %v750, %v758
        %v770 = vmul.f32 %v746, %v762
        %v771 = vmul.f32 %v751, %v758
        %v772 = vmul.f32 %v747, %v762
        %773 = vset.pattern.permute.xlu0 2
        %774 = vperm.xlu0 %773, %v538
        %v775 = vpop.permute.xlu0 %774
        %777 = vset.pattern.permute.xlu0 2
        %778 = vperm.xlu0 %777, %v539
        %v779 = vpop.permute.xlu0 %778
        %781 = vset.pattern.permute.xlu0 2
        %782 = vperm.xlu0 %781, %v540
        %v783 = vpop.permute.xlu0 %782
        %785 = vset.pattern.permute.xlu0 2
        %786 = vperm.xlu0 %785, %v541
        %v787 = vpop.permute.xlu0 %786
        %v789 = vmul.f32 %v765, %v775
        %v790 = vmul.f32 %v766, %v775
        %v791 = vmul.f32 %v767, %v779
        %v792 = vmul.f32 %v768, %v779
        %v793 = vmul.f32 %v769, %v783
        %v794 = vmul.f32 %v770, %v783
        %v795 = vmul.f32 %v771, %v787
        %v796 = vmul.f32 %v772, %v787
        %v797 = vadd.f32 %v719, %v789
        %v798 = vadd.f32 %v720, %v790
        %v799 = vadd.f32 %v721, %v791
        %v800 = vadd.f32 %v722, %v792
        %v801 = vadd.f32 %v723, %v793
        %v802 = vadd.f32 %v724, %v794
        %v803 = vadd.f32 %v725, %v795
        %v804 = vadd.f32 %v726, %v796
        %805 = vrot.lane.b32.xlu0 %v530, 1
        %v806 = vpop.permute.xlu0 %805
        %807 = vrot.lane.b32.xlu0 %v532, 1
        %v808 = vpop.permute.xlu0 %807
        %809 = vrot.lane.b32.xlu0 %v534, 1
        %v810 = vpop.permute.xlu0 %809
        %811 = vrot.lane.b32.xlu0 %v536, 1
        %v812 = vpop.permute.xlu0 %811
        %813 = vrot.lane.b32.xlu0 %v531, 1
        %v814 = vpop.permute.xlu0 %813
        %815 = vrot.lane.b32.xlu0 %v533, 1
        %v816 = vpop.permute.xlu0 %815
        %817 = vrot.lane.b32.xlu0 %v535, 1
        %v818 = vpop.permute.xlu0 %817
        %819 = vrot.lane.b32.xlu0 %v537, 1
        %v820 = vpop.permute.xlu0 %819
        %vm821 = vcmp.lt.s32.totalorder %v587, 1
        %v822 = vsel %vm821, %v806, %v814
        %v823 = vsel %vm821, %v808, %v816
        %v824 = vsel %vm821, %v810, %v818
        %v825 = vsel %vm821, %v812, %v820
        %v826 = vsel %vm821, %v814, %v806
        %v827 = vsel %vm821, %v816, %v808
        %v828 = vsel %vm821, %v818, %v810
        %v829 = vsel %vm821, %v820, %v812
        %s830 = scalar_lea.vmem %s5, 3
        %v831 = vld [vmem:[%s830] ss:$8 sm:$0x3]
        %v833 = vlaneseq
        %v834 = vshrl.u32 %v833, 7
        %v835 = vsub.s32 0, %v834
        %v836 = vrot.slane %v831, %v835
        %v837 = vlaneseq
        %v838 = vshrl.u32 %v837, 7
        %v839 = vsub.s32 1, %v838
        %v840 = vrot.slane %v831, %v839
        %v843 = vmul.f32 %v826, %v836
        %v844 = vmul.f32 %v822, %v840
        %v845 = vmul.f32 %v827, %v836
        %v846 = vmul.f32 %v823, %v840
        %v847 = vmul.f32 %v828, %v836
        %v848 = vmul.f32 %v824, %v840
        %v849 = vmul.f32 %v829, %v836
        %v850 = vmul.f32 %v825, %v840
        %851 = vset.pattern.permute.xlu0 3
        %852 = vperm.xlu0 %851, %v538
        %v853 = vpop.permute.xlu0 %852
        %855 = vset.pattern.permute.xlu0 3
        %856 = vperm.xlu0 %855, %v539
        %v857 = vpop.permute.xlu0 %856
        %859 = vset.pattern.permute.xlu0 3
        %860 = vperm.xlu0 %859, %v540
        %v861 = vpop.permute.xlu0 %860
        %863 = vset.pattern.permute.xlu0 3
        %864 = vperm.xlu0 %863, %v541
        %v865 = vpop.permute.xlu0 %864
        %v867 = vmul.f32 %v843, %v853
        %v868 = vmul.f32 %v844, %v853
        %v869 = vmul.f32 %v845, %v857
        %v870 = vmul.f32 %v846, %v857
        %v871 = vmul.f32 %v847, %v861
        %v872 = vmul.f32 %v848, %v861
        %v873 = vmul.f32 %v849, %v865
        %v874 = vmul.f32 %v850, %v865
        %v875 = vadd.f32 %v797, %v867
        %v876 = vadd.f32 %v798, %v868
        %v877 = vadd.f32 %v799, %v869
        %v878 = vadd.f32 %v800, %v870
        %v879 = vadd.f32 %v801, %v871
        %v880 = vadd.f32 %v802, %v872
        %v881 = vadd.f32 %v803, %v873
        %v882 = vadd.f32 %v804, %v874
        %883 = vrot.lane.b32.xlu0 %v530, 127
        %v884 = vpop.permute.xlu0 %883
        %885 = vrot.lane.b32.xlu0 %v532, 127
        %v886 = vpop.permute.xlu0 %885
        %887 = vrot.lane.b32.xlu0 %v534, 127
        %v888 = vpop.permute.xlu0 %887
        %889 = vrot.lane.b32.xlu0 %v536, 127
        %v890 = vpop.permute.xlu0 %889
        %891 = vrot.lane.b32.xlu0 %v531, 127
        %v892 = vpop.permute.xlu0 %891
        %893 = vrot.lane.b32.xlu0 %v533, 127
        %v894 = vpop.permute.xlu0 %893
        %895 = vrot.lane.b32.xlu0 %v535, 127
        %v896 = vpop.permute.xlu0 %895
        %897 = vrot.lane.b32.xlu0 %v537, 127
        %v898 = vpop.permute.xlu0 %897
        %vm899 = vcmp.lt.s32.totalorder %v587, 127
        %v900 = vsel %vm899, %v884, %v892
        %v901 = vsel %vm899, %v886, %v894
        %v902 = vsel %vm899, %v888, %v896
        %v903 = vsel %vm899, %v890, %v898
        %v904 = vsel %vm899, %v892, %v884
        %v905 = vsel %vm899, %v894, %v886
        %v906 = vsel %vm899, %v896, %v888
        %v907 = vsel %vm899, %v898, %v890
        %s908 = scalar_lea.vmem %s5, 5
        %v909 = vld [vmem:[%s908] ss:$8 sm:$0x3]
        %v911 = vlaneseq
        %v912 = vshrl.u32 %v911, 7
        %v913 = vsub.s32 0, %v912
        %v914 = vrot.slane %v909, %v913
        %v915 = vlaneseq
        %v916 = vshrl.u32 %v915, 7
        %v917 = vsub.s32 1, %v916
        %v918 = vrot.slane %v909, %v917
        %v921 = vmul.f32 %v900, %v914
        %v922 = vmul.f32 %v904, %v918
        %v923 = vmul.f32 %v901, %v914
        %v924 = vmul.f32 %v905, %v918
        %v925 = vmul.f32 %v902, %v914
        %v926 = vmul.f32 %v906, %v918
        %v927 = vmul.f32 %v903, %v914
        %v928 = vmul.f32 %v907, %v918
        %929 = vset.pattern.permute.xlu0 5
        %930 = vperm.xlu0 %929, %v538
        %v931 = vpop.permute.xlu0 %930
        %933 = vset.pattern.permute.xlu0 5
        %934 = vperm.xlu0 %933, %v539
        %v935 = vpop.permute.xlu0 %934
        %937 = vset.pattern.permute.xlu0 5
        %938 = vperm.xlu0 %937, %v540
        %v939 = vpop.permute.xlu0 %938
        %941 = vset.pattern.permute.xlu0 5
        %942 = vperm.xlu0 %941, %v541
        %v943 = vpop.permute.xlu0 %942
        %v945 = vmul.f32 %v921, %v931
        %v946 = vmul.f32 %v922, %v931
        %v947 = vmul.f32 %v923, %v935
        %v948 = vmul.f32 %v924, %v935
        %v949 = vmul.f32 %v925, %v939
        %v950 = vmul.f32 %v926, %v939
        %v951 = vmul.f32 %v927, %v943
        %v952 = vmul.f32 %v928, %v943
        %v953 = vadd.f32 %v875, %v945
        %v954 = vadd.f32 %v876, %v946
        %v955 = vadd.f32 %v877, %v947
        %v956 = vadd.f32 %v878, %v948
        %v957 = vadd.f32 %v879, %v949
        %v958 = vadd.f32 %v880, %v950
        %v959 = vadd.f32 %v881, %v951
        %v960 = vadd.f32 %v882, %v952
        %961 = vrot.lane.b32.xlu0 %v530, 113
        %v962 = vpop.permute.xlu0 %961
        %963 = vrot.lane.b32.xlu0 %v532, 113
        %v964 = vpop.permute.xlu0 %963
        %965 = vrot.lane.b32.xlu0 %v534, 113
        %v966 = vpop.permute.xlu0 %965
        %967 = vrot.lane.b32.xlu0 %v536, 113
        %v968 = vpop.permute.xlu0 %967
        %969 = vrot.lane.b32.xlu0 %v531, 113
        %v970 = vpop.permute.xlu0 %969
        %971 = vrot.lane.b32.xlu0 %v533, 113
        %v972 = vpop.permute.xlu0 %971
        %973 = vrot.lane.b32.xlu0 %v535, 113
        %v974 = vpop.permute.xlu0 %973
        %975 = vrot.lane.b32.xlu0 %v537, 113
        %v976 = vpop.permute.xlu0 %975
        %vm977 = vcmp.lt.s32.totalorder %v587, 113
        %v978 = vsel %vm977, %v962, %v970
        %v979 = vsel %vm977, %v964, %v972
        %v980 = vsel %vm977, %v966, %v974
        %v981 = vsel %vm977, %v968, %v976
        %v982 = vsel %vm977, %v970, %v962
        %v983 = vsel %vm977, %v972, %v964
        %v984 = vsel %vm977, %v974, %v966
        %v985 = vsel %vm977, %v976, %v968
        %s986 = scalar_lea.vmem %s5, 6
        %v987 = vld [vmem:[%s986] ss:$8 sm:$0x3]
        %v989 = vlaneseq
        %v990 = vshrl.u32 %v989, 7
        %v991 = vsub.s32 0, %v990
        %v992 = vrot.slane %v987, %v991
        %v993 = vlaneseq
        %v994 = vshrl.u32 %v993, 7
        %v995 = vsub.s32 1, %v994
        %v996 = vrot.slane %v987, %v995
        %v999 = vmul.f32 %v978, %v992
        %v1000 = vmul.f32 %v982, %v996
        %v1001 = vmul.f32 %v979, %v992
        %v1002 = vmul.f32 %v983, %v996
        %v1003 = vmul.f32 %v980, %v992
        %v1004 = vmul.f32 %v984, %v996
        %v1005 = vmul.f32 %v981, %v992
        %v1006 = vmul.f32 %v985, %v996
        %1007 = vset.pattern.permute.xlu0 6
        %1008 = vperm.xlu0 %1007, %v538
        %v1009 = vpop.permute.xlu0 %1008
        %1011 = vset.pattern.permute.xlu0 6
        %1012 = vperm.xlu0 %1011, %v539
        %v1013 = vpop.permute.xlu0 %1012
        %1015 = vset.pattern.permute.xlu0 6
        %1016 = vperm.xlu0 %1015, %v540
        %v1017 = vpop.permute.xlu0 %1016
        %1019 = vset.pattern.permute.xlu0 6
        %1020 = vperm.xlu0 %1019, %v541
        %v1021 = vpop.permute.xlu0 %1020
        %v1023 = vmul.f32 %v999, %v1009
        %v1024 = vmul.f32 %v1000, %v1009
        %v1025 = vmul.f32 %v1001, %v1013
        %v1026 = vmul.f32 %v1002, %v1013
        %v1027 = vmul.f32 %v1003, %v1017
        %v1028 = vmul.f32 %v1004, %v1017
        %v1029 = vmul.f32 %v1005, %v1021
        %v1030 = vmul.f32 %v1006, %v1021
        %v1031 = vadd.f32 %v953, %v1023
        %v1032 = vadd.f32 %v954, %v1024
        %v1033 = vadd.f32 %v955, %v1025
        %v1034 = vadd.f32 %v956, %v1026
        %v1035 = vadd.f32 %v957, %v1027
        %v1036 = vadd.f32 %v958, %v1028
        %v1037 = vadd.f32 %v959, %v1029
        %v1038 = vadd.f32 %v960, %v1030
        %1039 = vrot.lane.b32.xlu0 %v530, 112
        %v1040 = vpop.permute.xlu0 %1039
        %1041 = vrot.lane.b32.xlu0 %v532, 112
        %v1042 = vpop.permute.xlu0 %1041
        %1043 = vrot.lane.b32.xlu0 %v534, 112
        %v1044 = vpop.permute.xlu0 %1043
        %1045 = vrot.lane.b32.xlu0 %v536, 112
        %v1046 = vpop.permute.xlu0 %1045
        %1047 = vrot.lane.b32.xlu0 %v531, 112
        %v1048 = vpop.permute.xlu0 %1047
        %1049 = vrot.lane.b32.xlu0 %v533, 112
        %v1050 = vpop.permute.xlu0 %1049
        %1051 = vrot.lane.b32.xlu0 %v535, 112
        %v1052 = vpop.permute.xlu0 %1051
        %1053 = vrot.lane.b32.xlu0 %v537, 112
        %v1054 = vpop.permute.xlu0 %1053
        %vm1055 = vcmp.lt.s32.totalorder %v587, 112
        %v1056 = vsel %vm1055, %v1040, %v1048
        %v1057 = vsel %vm1055, %v1042, %v1050
        %v1058 = vsel %vm1055, %v1044, %v1052
        %v1059 = vsel %vm1055, %v1046, %v1054
        %v1060 = vsel %vm1055, %v1048, %v1040
        %v1061 = vsel %vm1055, %v1050, %v1042
        %v1062 = vsel %vm1055, %v1052, %v1044
        %v1063 = vsel %vm1055, %v1054, %v1046
        %s1064 = scalar_lea.vmem %s5, 7
        %v1065 = vld [vmem:[%s1064] ss:$8 sm:$0x3]
        %v1067 = vlaneseq
        %v1068 = vshrl.u32 %v1067, 7
        %v1069 = vsub.s32 0, %v1068
        %v1070 = vrot.slane %v1065, %v1069
        %v1071 = vlaneseq
        %v1072 = vshrl.u32 %v1071, 7
        %v1073 = vsub.s32 1, %v1072
        %v1074 = vrot.slane %v1065, %v1073
        %v1077 = vmul.f32 %v1056, %v1070
        %v1078 = vmul.f32 %v1060, %v1074
        %v1079 = vmul.f32 %v1057, %v1070
        %v1080 = vmul.f32 %v1061, %v1074
        %v1081 = vmul.f32 %v1058, %v1070
        %v1082 = vmul.f32 %v1062, %v1074
        %v1083 = vmul.f32 %v1059, %v1070
        %v1084 = vmul.f32 %v1063, %v1074
        %1085 = vset.pattern.permute.xlu0 7
        %1086 = vperm.xlu0 %1085, %v538
        %v1087 = vpop.permute.xlu0 %1086
        %1089 = vset.pattern.permute.xlu0 7
        %1090 = vperm.xlu0 %1089, %v539
        %v1091 = vpop.permute.xlu0 %1090
        %1093 = vset.pattern.permute.xlu0 7
        %1094 = vperm.xlu0 %1093, %v540
        %v1095 = vpop.permute.xlu0 %1094
        %1097 = vset.pattern.permute.xlu0 7
        %1098 = vperm.xlu0 %1097, %v541
        %v1099 = vpop.permute.xlu0 %1098
        %v1101 = vmul.f32 %v1077, %v1087
        %v1102 = vmul.f32 %v1078, %v1087
        %v1103 = vmul.f32 %v1079, %v1091
        %v1104 = vmul.f32 %v1080, %v1091
        %v1105 = vmul.f32 %v1081, %v1095
        %v1106 = vmul.f32 %v1082, %v1095
        %v1107 = vmul.f32 %v1083, %v1099
        %v1108 = vmul.f32 %v1084, %v1099
        %v1109 = vadd.f32 %v1031, %v1101
        %v1110 = vadd.f32 %v1032, %v1102
        %v1111 = vadd.f32 %v1033, %v1103
        %v1112 = vadd.f32 %v1034, %v1104
        %v1113 = vadd.f32 %v1035, %v1105
        %v1114 = vadd.f32 %v1036, %v1106
        %v1115 = vadd.f32 %v1037, %v1107
        %v1116 = vadd.f32 %v1038, %v1108
        %1117 = vrot.lane.b32.xlu0 %v530, 111
        %v1118 = vpop.permute.xlu0 %1117
        %1119 = vrot.lane.b32.xlu0 %v532, 111
        %v1120 = vpop.permute.xlu0 %1119
        %1121 = vrot.lane.b32.xlu0 %v534, 111
        %v1122 = vpop.permute.xlu0 %1121
        %1123 = vrot.lane.b32.xlu0 %v536, 111
        %v1124 = vpop.permute.xlu0 %1123
        %1125 = vrot.lane.b32.xlu0 %v531, 111
        %v1126 = vpop.permute.xlu0 %1125
        %1127 = vrot.lane.b32.xlu0 %v533, 111
        %v1128 = vpop.permute.xlu0 %1127
        %1129 = vrot.lane.b32.xlu0 %v535, 111
        %v1130 = vpop.permute.xlu0 %1129
        %1131 = vrot.lane.b32.xlu0 %v537, 111
        %v1132 = vpop.permute.xlu0 %1131
        %vm1133 = vcmp.lt.s32.totalorder %v587, 111
        %v1134 = vsel %vm1133, %v1118, %v1126
        %v1135 = vsel %vm1133, %v1120, %v1128
        %v1136 = vsel %vm1133, %v1122, %v1130
        %v1137 = vsel %vm1133, %v1124, %v1132
        %v1138 = vsel %vm1133, %v1126, %v1118
        %v1139 = vsel %vm1133, %v1128, %v1120
        %v1140 = vsel %vm1133, %v1130, %v1122
        %v1141 = vsel %vm1133, %v1132, %v1124
        %s1142 = scalar_lea.vmem %s5, 16
        %v1143 = vld [vmem:[%s1142] ss:$8 sm:$0x3]
        %v1145 = vlaneseq
        %v1146 = vshrl.u32 %v1145, 7
        %v1147 = vsub.s32 0, %v1146
        %v1148 = vrot.slane %v1143, %v1147
        %v1149 = vlaneseq
        %v1150 = vshrl.u32 %v1149, 7
        %v1151 = vsub.s32 1, %v1150
        %v1152 = vrot.slane %v1143, %v1151
        %v1155 = vmul.f32 %v1134, %v1148
        %v1156 = vmul.f32 %v1138, %v1152
        %v1157 = vmul.f32 %v1135, %v1148
        %v1158 = vmul.f32 %v1139, %v1152
        %v1159 = vmul.f32 %v1136, %v1148
        %v1160 = vmul.f32 %v1140, %v1152
        %v1161 = vmul.f32 %v1137, %v1148
        %v1162 = vmul.f32 %v1141, %v1152
        %1163 = vset.pattern.permute.xlu0 8
        %1164 = vperm.xlu0 %1163, %v538
        %v1165 = vpop.permute.xlu0 %1164
        %1167 = vset.pattern.permute.xlu0 8
        %1168 = vperm.xlu0 %1167, %v539
        %v1169 = vpop.permute.xlu0 %1168
        %1171 = vset.pattern.permute.xlu0 8
        %1172 = vperm.xlu0 %1171, %v540
        %v1173 = vpop.permute.xlu0 %1172
        %1175 = vset.pattern.permute.xlu0 8
        %1176 = vperm.xlu0 %1175, %v541
        %v1177 = vpop.permute.xlu0 %1176
        %v1179 = vmul.f32 %v1155, %v1165
        %v1180 = vmul.f32 %v1156, %v1165
        %v1181 = vmul.f32 %v1157, %v1169
        %v1182 = vmul.f32 %v1158, %v1169
        %v1183 = vmul.f32 %v1159, %v1173
        %v1184 = vmul.f32 %v1160, %v1173
        %v1185 = vmul.f32 %v1161, %v1177
        %v1186 = vmul.f32 %v1162, %v1177
        %v1187 = vadd.f32 %v1109, %v1179
        %v1188 = vadd.f32 %v1110, %v1180
        %v1189 = vadd.f32 %v1111, %v1181
        %v1190 = vadd.f32 %v1112, %v1182
        %v1191 = vadd.f32 %v1113, %v1183
        %v1192 = vadd.f32 %v1114, %v1184
        %v1193 = vadd.f32 %v1115, %v1185
        %v1194 = vadd.f32 %v1116, %v1186
        %v1195 = vld [vmem:[%s4] sm:$0xff]
        %v1196 = vld [vmem:[%s4 + $0x8] sm:$0xff]
        %v1197 = vld [vmem:[%s4 + $0x10] sm:$0xff]
        %v1198 = vld [vmem:[%s4 + $0x18] sm:$0xff]
        %1200 = vset.pattern.permute.xlu0 0
        %1201 = vperm.xlu0 %1200, %v1195
        %v1202 = vpop.permute.xlu0 %1201
        %1205 = vset.pattern.permute.xlu0 0
        %1206 = vperm.xlu0 %1205, %v1196
        %v1207 = vpop.permute.xlu0 %1206
        %1210 = vset.pattern.permute.xlu0 0
        %1211 = vperm.xlu0 %1210, %v1197
        %v1212 = vpop.permute.xlu0 %1211
        %1215 = vset.pattern.permute.xlu0 0
        %1216 = vperm.xlu0 %1215, %v1198
        %v1217 = vpop.permute.xlu0 %1216
        %v1219 = vadd.f32 %v1187, %v1202
        %v1220 = vadd.f32 %v1188, %v1202
        %v1221 = vadd.f32 %v1189, %v1207
        %v1222 = vadd.f32 %v1190, %v1207
        %v1223 = vadd.f32 %v1191, %v1212
        %v1224 = vadd.f32 %v1192, %v1212
        %v1225 = vadd.f32 %v1193, %v1217
        %v1226 = vadd.f32 %v1194, %v1217
        %v1227 = vmax.f32 %v1219, 0.0
        %v1228 = vmax.f32 %v1220, 0.0
        %v1229 = vmax.f32 %v1221, 0.0
        %v1230 = vmax.f32 %v1222, 0.0
        %v1231 = vmax.f32 %v1223, 0.0
        %v1232 = vmax.f32 %v1224, 0.0
        %v1233 = vmax.f32 %v1225, 0.0
        %v1234 = vmax.f32 %v1226, 0.0
        %v1235 = vmin.f32 %v1227, 6.0
        %v1236 = vmin.f32 %v1228, 6.0
        %v1237 = vmin.f32 %v1229, 6.0
        %v1238 = vmin.f32 %v1230, 6.0
        %v1239 = vmin.f32 %v1231, 6.0
        %v1240 = vmin.f32 %v1232, 6.0
        %v1241 = vmin.f32 %v1233, 6.0
        %v1242 = vmin.f32 %v1234, 6.0
        %v1243 = vld [vmem:[%s10] sm:$0xff]
        %s1244 = scalar_lea.vmem %s5, 4
        %v1245 = vld [vmem:[%s1244] ss:$8 sm:$0x3]
        %v1247 = vlaneseq
        %v1248 = vshrl.u32 %v1247, 7
        %v1249 = vsub.s32 0, %v1248
        %v1250 = vrot.slane %v1245, %v1249
        %v1251 = vlaneseq
        %v1252 = vshrl.u32 %v1251, 7
        %v1253 = vsub.s32 1, %v1252
        %v1254 = vrot.slane %v1245, %v1253
        %1257 = vmatprep.subr.mxu0 0.0
        %1258 = vmatpush1.xpose.msra.mxu0 0.0
        %1259 = vmatprep.subr.mxu0 0.0
        %1260 = vmatpush1.xpose.msra.mxu0 0.0
        %1261 = vmatprep.subr.mxu0 0.0
        %1262 = vmatpush1.xpose.msra.mxu0 0.0
        %1263 = vmatprep.subr.mxu0 0.0
        %1264 = vmatpush1.xpose.msra.mxu0 0.0
        %1265 = vmatprep.subr.mxu0 0.0
        %1266 = vmatpush1.xpose.msra.mxu0 0.0
        %1267 = vmatprep.subr.mxu0 0.0
        %1268 = vmatpush1.xpose.msra.mxu0 0.0
        %1269 = vmatprep.subr.mxu0 0.0
        %1270 = vmatpush1.xpose.msra.mxu0 0.0
        %1271 = vmatprep.subr.mxu0 0.0
        %1272 = vmatpush1.xpose.msra.mxu0 0.0
        %1273 = vmatprep.subr.mxu0 0.0
        %1274 = vmatpush1.xpose.msra.mxu0 0.0
        %1275 = vmatprep.subr.mxu0 0.0
        %1276 = vmatpush1.xpose.msra.mxu0 0.0
        %1277 = vmatprep.subr.mxu0 0.0
        %1278 = vmatpush1.xpose.msra.mxu0 0.0
        %1279 = vmatprep.subr.mxu0 0.0
        %1280 = vmatpush1.xpose.msra.mxu0 0.0
        %1281 = vmatprep.subr.mxu0 %v1242
        %1282 = vmatpush1.xpose.msra.mxu0 %v1241
        %1283 = vmatprep.subr.mxu0 %v1240
        %1284 = vmatpush1.xpose.msra.mxu0 %v1239
        %1285 = vmatprep.subr.mxu0 %v1238
        %1286 = vmatpush1.xpose.msra.mxu0 %v1237
        %1287 = vmatprep.subr.mxu0 %v1236
        %1288 = vmatpush1.xpose.msra.mxu0 %v1235
        %1289 = vmatprep.subr.mxu0 0.0
        %1290 = vmatpush2.xpose.msra.mxu0 0.0
        %1291 = vmatprep.subr.mxu0 0.0
        %1292 = vmatpush2.xpose.msra.mxu0 0.0
        %1293 = vmatprep.subr.mxu0 0.0
        %1294 = vmatpush2.xpose.msra.mxu0 0.0
        %1295 = vmatprep.subr.mxu0 0.0
        %1296 = vmatpush2.xpose.msra.mxu0 0.0
        %1297 = vmatprep.subr.mxu0 0.0
        %1298 = vmatpush2.xpose.msra.mxu0 0.0
        %1299 = vmatprep.subr.mxu0 0.0
        %1300 = vmatpush2.xpose.msra.mxu0 0.0
        %1301 = vmatprep.subr.mxu0 0.0
        %1302 = vmatpush2.xpose.msra.mxu0 0.0
        %1303 = vmatprep.subr.mxu0 0.0
        %1304 = vmatpush2.xpose.msra.mxu0 0.0
        %1305 = vmatprep.subr.mxu0 0.0
        %1306 = vmatpush2.xpose.msra.mxu0 0.0
        %1307 = vmatprep.subr.mxu0 0.0
        %1308 = vmatpush2.xpose.msra.mxu0 0.0
        %1309 = vmatprep.subr.mxu0 0.0
        %1310 = vmatpush2.xpose.msra.mxu0 0.0
        %1311 = vmatprep.subr.mxu0 0.0
        %1312 = vmatpush2.xpose.msra.mxu0 0.0
        %1313 = vmatprep.subr.mxu0 0.0
        %1314 = vmatpush2.xpose.msra.mxu0 0.0
        %1315 = vmatprep.subr.mxu0 0.0
        %1316 = vmatpush2.xpose.msra.mxu0 0.0
        %1317 = vmatprep.subr.mxu0 0.0
        %1318 = vmatpush2.xpose.msra.mxu0 0.0
        %1319 = vmatprep.subr.mxu0 0.0
        %1320 = vmatpush2.xpose.msra.mxu0 0.0
        %1321 = vmatprep.mubr.f32.mxu0 %v1254
        %1322 = vmatmul.mubr.f32.gmra.mxu0 %v1250
        %v1323 = vpop.f32.mrf.mxu0
        %v1324 = vadd.f32 0.0, %v1323
        %v1325 = vpop.f32.mrf.mxu0
        %1326 = vdwg.mxu0
        %v1327 = vmul.f32 %v1324, 0.00390625
        %v1328 = vld [vmem:[%s6] sm:$0xff]
        %v1329 = vld [vmem:[%s6 + $0x8] sm:$0xff]
        %v1330 = vld [vmem:[%s6 + $0x10] sm:$0xff]
        %v1331 = vld [vmem:[%s6 + $0x18] sm:$0xff]
        %v1332 = vld [vmem:[%s7] sm:$0x1]
        %vm1333 = vcmask 261120
        %v1335 = vsel %vm1333, %v1327, 0
        %1337 = vmatprep.subr.mxu0 0.0
        %1338 = vmatpush1.msra.mxu0 0.0
        %1339 = vmatprep.subr.mxu0 0.0
        %1340 = vmatpush1.msra.mxu0 0.0
        %1341 = vmatprep.subr.mxu0 0.0
        %1342 = vmatpush1.msra.mxu0 0.0
        %1343 = vmatprep.subr.mxu0 0.0
        %1344 = vmatpush1.msra.mxu0 0.0
        %1345 = vmatprep.subr.mxu0 0.0
        %1346 = vmatpush1.msra.mxu0 0.0
        %1347 = vmatprep.subr.mxu0 0.0
        %1348 = vmatpush1.msra.mxu0 0.0
        %1349 = vmatprep.subr.mxu0 0.0
        %1350 = vmatpush1.msra.mxu0 0.0
        %1351 = vmatprep.subr.mxu0 0.0
        %1352 = vmatpush1.msra.mxu0 0.0
        %1353 = vmatprep.subr.mxu0 0.0
        %1354 = vmatpush1.msra.mxu0 0.0
        %1355 = vmatprep.subr.mxu0 0.0
        %1356 = vmatpush1.msra.mxu0 0.0
        %1357 = vmatprep.subr.mxu0 0.0
        %1358 = vmatpush1.msra.mxu0 0.0
        %1359 = vmatprep.subr.mxu0 0.0
        %1360 = vmatpush1.msra.mxu0 0.0
        %1361 = vmatprep.subr.mxu0 0.0
        %1362 = vmatpush1.msra.mxu0 %v1331
        %1363 = vmatprep.subr.mxu0 0.0
        %1364 = vmatpush1.msra.mxu0 %v1330
        %1365 = vmatprep.subr.mxu0 0.0
        %1366 = vmatpush1.msra.mxu0 %v1329
        %1367 = vmatprep.subr.mxu0 0.0
        %1368 = vmatpush1.msra.mxu0 %v1328
        %1369 = vmatprep.subr.mxu0 0.0
        %1370 = vmatpush2.msra.mxu0 0.0
        %1371 = vmatprep.subr.mxu0 0.0
        %1372 = vmatpush2.msra.mxu0 0.0
        %1373 = vmatprep.subr.mxu0 0.0
        %1374 = vmatpush2.msra.mxu0 0.0
        %1375 = vmatprep.subr.mxu0 0.0
        %1376 = vmatpush2.msra.mxu0 0.0
        %1377 = vmatprep.subr.mxu0 0.0
        %1378 = vmatpush2.msra.mxu0 0.0
        %1379 = vmatprep.subr.mxu0 0.0
        %1380 = vmatpush2.msra.mxu0 0.0
        %1381 = vmatprep.subr.mxu0 0.0
        %1382 = vmatpush2.msra.mxu0 0.0
        %1383 = vmatprep.subr.mxu0 0.0
        %1384 = vmatpush2.msra.mxu0 0.0
        %1385 = vmatprep.subr.mxu0 0.0
        %1386 = vmatpush2.msra.mxu0 0.0
        %1387 = vmatprep.subr.mxu0 0.0
        %1388 = vmatpush2.msra.mxu0 0.0
        %1389 = vmatprep.subr.mxu0 0.0
        %1390 = vmatpush2.msra.mxu0 0.0
        %1391 = vmatprep.subr.mxu0 0.0
        %1392 = vmatpush2.msra.mxu0 0.0
        %1393 = vmatprep.subr.mxu0 0.0
        %1394 = vmatpush2.msra.mxu0 0.0
        %1395 = vmatprep.subr.mxu0 0.0
        %1396 = vmatpush2.msra.mxu0 0.0
        %1397 = vmatprep.subr.mxu0 0.0
        %1398 = vmatpush2.msra.mxu0 0.0
        %1399 = vmatprep.subr.mxu0 0.0
        %1400 = vmatpush2.msra.mxu0 0.0
        %1401 = vmatprep.mubr.f32.mxu0 0.0
        %1402 = vmatmul.mubr.f32.gmra.mxu0 %v1335
        %v1403 = vpop.f32.mrf.mxu0
        %v1404 = vadd.f32 %v1332, %v1403
        %v1405 = vpop.f32.mrf.mxu0
        %1406 = vdwg.mxu0
        %v1407 = vmax.f32 %v1404, 0.0
        %v1408 = vld [vmem:[%s8] sm:$0xff]
        %v1409 = vld [vmem:[%s9] sm:$0x1]
        %v1411 = vsel %vm455, %v1407, 0
        %1413 = vmatprep.subr.mxu0 0.0
        %1414 = vmatpush1.msra.mxu0 0.0
        %1415 = vmatprep.subr.mxu0 0.0
        %1416 = vmatpush1.msra.mxu0 0.0
        %1417 = vmatprep.subr.mxu0 0.0
        %1418 = vmatpush1.msra.mxu0 0.0
        %1419 = vmatprep.subr.mxu0 0.0
        %1420 = vmatpush1.msra.mxu0 0.0
        %1421 = vmatprep.subr.mxu0 0.0
        %1422 = vmatpush1.msra.mxu0 0.0
        %1423 = vmatprep.subr.mxu0 0.0
        %1424 = vmatpush1.msra.mxu0 0.0
        %1425 = vmatprep.subr.mxu0 0.0
        %1426 = vmatpush1.msra.mxu0 0.0
        %1427 = vmatprep.subr.mxu0 0.0
        %1428 = vmatpush1.msra.mxu0 0.0
        %1429 = vmatprep.subr.mxu0 0.0
        %1430 = vmatpush1.msra.mxu0 0.0
        %1431 = vmatprep.subr.mxu0 0.0
        %1432 = vmatpush1.msra.mxu0 0.0
        %1433 = vmatprep.subr.mxu0 0.0
        %1434 = vmatpush1.msra.mxu0 0.0
        %1435 = vmatprep.subr.mxu0 0.0
        %1436 = vmatpush1.msra.mxu0 0.0
        %1437 = vmatprep.subr.mxu0 0.0
        %1438 = vmatpush1.msra.mxu0 0.0
        %1439 = vmatprep.subr.mxu0 0.0
        %1440 = vmatpush1.msra.mxu0 0.0
        %1441 = vmatprep.subr.mxu0 0.0
        %1442 = vmatpush1.msra.mxu0 0.0
        %1443 = vmatprep.subr.mxu0 0.0
        %1444 = vmatpush1.msra.mxu0 %v1408
        %1445 = vmatprep.subr.mxu0 0.0
        %1446 = vmatpush2.msra.mxu0 0.0
        %1447 = vmatprep.subr.mxu0 0.0
        %1448 = vmatpush2.msra.mxu0 0.0
        %1449 = vmatprep.subr.mxu0 0.0
        %1450 = vmatpush2.msra.mxu0 0.0
        %1451 = vmatprep.subr.mxu0 0.0
        %1452 = vmatpush2.msra.mxu0 0.0
        %1453 = vmatprep.subr.mxu0 0.0
        %1454 = vmatpush2.msra.mxu0 0.0
        %1455 = vmatprep.subr.mxu0 0.0
        %1456 = vmatpush2.msra.mxu0 0.0
        %1457 = vmatprep.subr.mxu0 0.0
        %1458 = vmatpush2.msra.mxu0 0.0
        %1459 = vmatprep.subr.mxu0 0.0
        %1460 = vmatpush2.msra.mxu0 0.0
        %1461 = vmatprep.subr.mxu0 0.0
        %1462 = vmatpush2.msra.mxu0 0.0
        %1463 = vmatprep.subr.mxu0 0.0
        %1464 = vmatpush2.msra.mxu0 0.0
        %1465 = vmatprep.subr.mxu0 0.0
        %1466 = vmatpush2.msra.mxu0 0.0
        %1467 = vmatprep.subr.mxu0 0.0
        %1468 = vmatpush2.msra.mxu0 0.0
        %1469 = vmatprep.subr.mxu0 0.0
        %1470 = vmatpush2.msra.mxu0 0.0
        %1471 = vmatprep.subr.mxu0 0.0
        %1472 = vmatpush2.msra.mxu0 0.0
        %1473 = vmatprep.subr.mxu0 0.0
        %1474 = vmatpush2.msra.mxu0 0.0
        %1475 = vmatprep.subr.mxu0 0.0
        %1476 = vmatpush2.msra.mxu0 0.0
        %1477 = vmatprep.mubr.f32.mxu0 0.0
        %1478 = vmatmul.mubr.f32.gmra.mxu0 %v1411
        %v1479 = vpop.f32.mrf.mxu0
        %v1480 = vadd.f32 %v1409, %v1479
        %v1481 = vpop.f32.mrf.mxu0
        %1482 = vdwg.mxu0
        %v1483 = vxor.u32 %v1480, 2147483648
        %v1484 = vmul.f32 %v1483, 1.442695
        %v1485 = vpow.pop %v1484
        %v1486 = vadd.f32 %v1485, 1.0
        %v1487 = vrcp.pop %v1486
        %v1488 = vmul.f32 1.0, %v1487
        %v1489 = vlaneseq
        %v1490 = vshrl.u32 %v1489, 7
        %v1491 = vsub.s32 0, %v1490
        %v1492 = vrot.slane %v1488, %v1491
        %v1493 = vmul.f32 %v1243, %v1492
        %v1494 = vpack.c.bf16 %v1493, %v1493
        %v1495 = vpack.c.bf16 %v1237, %v1235
        %v1496 = vpack.c.bf16 %v1238, %v1236
        %v1497 = vpack.c.bf16 %v1241, %v1239
        %v1498 = vpack.c.bf16 %v1242, %v1240
        %v1499 = vld [vmem:[%s11] sm:$0xff]
        %1501 = vset.pattern.permute.xlu0 0
        %1502 = vperm.xlu0 %1501, %v1499
        %v1503 = vpop.permute.xlu0 %1502
        %v1506 = vsel %vm1333, %v1494, 0
        %1508 = vmatprep.subr.bf16.mxu0 0
        %1509 = vmatpush1.bf16.msra.mxu0 0
        %1510 = vmatprep.subr.bf16.mxu0 0
        %1511 = vmatpush1.bf16.msra.mxu0 0
        %1512 = vmatprep.subr.bf16.mxu0 0
        %1513 = vmatpush1.bf16.msra.mxu0 0
        %1514 = vmatprep.subr.bf16.mxu0 0
        %1515 = vmatpush1.bf16.msra.mxu0 0
        %1516 = vmatprep.subr.bf16.mxu0 0
        %1517 = vmatpush1.bf16.msra.mxu0 0
        %1518 = vmatprep.subr.bf16.mxu0 0
        %1519 = vmatpush1.bf16.msra.mxu0 0
        %1520 = vmatprep.subr.bf16.mxu0 %v1498
        %1521 = vmatpush1.bf16.msra.mxu0 %v1497
        %1522 = vmatprep.subr.bf16.mxu0 %v1496
        %1523 = vmatpush1.bf16.msra.mxu0 %v1495
        %1524 = vmatprep.subr.bf16.mxu0 0
        %1525 = vmatpush2.bf16.msra.mxu0 0
        %1526 = vmatprep.subr.bf16.mxu0 0
        %1527 = vmatpush2.bf16.msra.mxu0 0
        %1528 = vmatprep.subr.bf16.mxu0 0
        %1529 = vmatpush2.bf16.msra.mxu0 0
        %1530 = vmatprep.subr.bf16.mxu0 0
        %1531 = vmatpush2.bf16.msra.mxu0 0
        %1532 = vmatprep.subr.bf16.mxu0 0
        %1533 = vmatpush2.bf16.msra.mxu0 0
        %1534 = vmatprep.subr.bf16.mxu0 0
        %1535 = vmatpush2.bf16.msra.mxu0 0
        %1536 = vmatprep.subr.bf16.mxu0 0
        %1537 = vmatpush2.bf16.msra.mxu0 0
        %1538 = vmatprep.subr.bf16.mxu0 0
        %1539 = vmatpush2.bf16.msra.mxu0 0
        %1540 = vmatprep.mubr.bf16.mxu0 0
        %1541 = vmatmul.mubr.bf16.gmra.mxu0 %v1506
        %v1542 = vpop.f32.mrf.mxu0
        %v1543 = vadd.f32 %v1503, %v1542
        %v1544 = vpop.f32.mrf.mxu0
        %v1545 = vadd.f32 %v1503, %v1544
        %v1546 = vpop.f32.mrf.mxu0
        %v1547 = vpop.f32.mrf.mxu0
        %1548 = vdwg.mxu0
        %v1549 = vadd.f32 %v1543, %v413
        %v1550 = vadd.f32 %v1545, %v414
        %1551 = vst [vmem:[%s406] sm:$0xff] %v1549
        %1552 = vst [vmem:[%s406 + $0x8] sm:$0xff] %v1550
        %s1553 = sand.u32 %s291, 1
        %s1554 = scalar_lea.sflag [#allocation3], %s1553
        %s1555 = sand.u32 %s291, 1
        %s1556 = smul.addr %s1555, 16
        %s1557 = scalar_lea.vmem [#allocation2], %s1556
        // Predicated region
        $region69: #{tpu_custom_call.1} parent=67 // pred_check
          %p1558 = pneg %p301
        $region70: #{tpu_custom_call.1} parent=67 // pred_check_branch
          %1560 = sbr.rel (%p1558) target = $region72
        $region71: #{tpu_custom_call.1} parent=67 // pred_region
          %s1562 = ssub.s32 256, 256
          %1563 = vsyncadd %s1554, %s1562
          %s1564 = smul.addr %s26, 2
          %s1565 = smul.addr %s1564, 128
          %s1566 = scalar_lea.hbm %s12, %s1565
          %s1568 = sshll.u32 %s1557, 4
          %s1569 = int_to_ptr.vmem [resolvable:$true] %s1568
          %1571 = dma.vmem_to_hbm [thread:$0]  %s1569, 256, %s1566, %s1554
        $region72: #{tpu_custom_call.1} parent=67 // pred_fallthru
          _
      $region68: #{tpu_custom_call.1} parent=5 // pred_fallthru
        _
      %p1572 = scmp.le.s32.totalorder 2, %s21
      // Predicated region
      $region73: #{tpu_custom_call.1} parent=5 // pred_check
        %p1573 = pneg %p1572
      $region74: #{tpu_custom_call.1} parent=5 // pred_check_branch
        %1575 = sbr.rel (%p1573) target = $region76
      $region75: #{tpu_custom_call.1} parent=5 // pred_region
        %s1576 = ssub.s32 %s21, 2
        // Predicated region
        $region77: #{tpu_custom_call.1} parent=75 // pred_check
          %p1577 = pneg %p307
        $region78: #{tpu_custom_call.1} parent=75 // pred_check_branch
          %1579 = sbr.rel (%p1577) target = $region80
        $region79: #{tpu_custom_call.1} parent=75 // pred_region
          %s1580 = sand.u32 %s292, 1
          %s1581 = scalar_lea.sflag [#allocation3], %s1580
          %s1582 = sand.u32 %s292, 1
          %s1583 = smul.addr %s1582, 16
          %s1584 = scalar_lea.vmem [#allocation2], %s1583
          %1585 = dma.done %s1581, 256
        $region80: #{tpu_custom_call.1} parent=75 // pred_fallthru
          _
      $region76: #{tpu_custom_call.1} parent=5 // pred_fallthru
        _
    $region6: #{tpu_custom_call.1} parent=1 // loop_footer
      %s25 = sadd.s32 1, %s21
    $region7: #{tpu_custom_call.1} parent=1 // loop_footer_branch
      %20 = sbr.rel target = $region3
    $region8: #{tpu_custom_call.1} parent=1 // loop_exit
      _
    %1586 = vsyncpa [#allocation3], 1
    %s1587 = scalar_lea.sflag [#allocation3], 1
    %1588 = vsyncpa %s1587, 1

</llo_original>
